<compile_context>
chip_gen: v6e
topology: v6e:2x2x1
jax: 0.10.0
libtpu: 0.0.40
codegen_flags: <defaults>
</compile_context>

<pallas_src>
import functools

import jax
import jax.numpy as jnp
from jax.experimental import pallas as pl
from jax.experimental.pallas import tpu as pltpu

_D_EMA = 12


def _fs2_loss_kernel(ema_t_ref, ema_p_ref,
                     pitch_p_ref, energy_p_ref, per_p_ref,
                     pitch_t_ref, energy_t_ref, per_t_ref,
                     bn_mask_ref,
                     dur_t_ref, logdur_p_ref, src_mask_ref,
                     out_ref, acc_ref, *, t_bn):
    """Grid axis 0 walks the bn time axis; SMEM scratch carries partial sums.

    acc_ref layout: [ema_sum, periodicity_sum, pitch_sum, energy_sum, bn_count]
    out_ref layout: [total, ema, periodicity, pitch, energy, duration]
    """
    f32 = jnp.float32
    step = pl.program_id(0)
    n_steps = pl.num_programs(0)
    _, tile = bn_mask_ref.shape

    # valid = not-padded AND inside the true bn length.  The last tile (and the
    # unsliced ema target) may be pipeline-padded with undefined values, so the
    # bounds mask (from iota, deterministic) must dominate and we mask with
    # jnp.where (select) rather than multiply, so garbage never propagates.
    col = jax.lax.broadcasted_iota(jnp.int32, bn_mask_ref.shape, 1)
    in_bounds = (step * tile + col) < t_bn
    valid = jnp.logical_and(in_bounds, bn_mask_ref[...] == 0)        # (B, tile)

    # --- ema: reduce the 12-wide channel axis first, then mask in 2-D --------
    # (avoids a lane-sparse 3-D mask broadcast / relayout; the axis=-1 reduce
    #  runs on the XLU slot next to the VPU work)
    ema_d = ema_p_ref[...].astype(f32) - ema_t_ref[...].astype(f32)  # (B,tile,12)
    ema_sq = jnp.sum(ema_d * ema_d, axis=-1)                         # (B, tile)
    ema_sum = jnp.sum(jnp.where(valid, ema_sq, 0.0))

    # --- pitch / energy / periodicity on lane-dense (B, tile) blocks ---------
    def masked_sq_sum(p_ref, t_ref):
        d = p_ref[...].astype(f32) - t_ref[...].astype(f32)
        return jnp.sum(jnp.where(valid, d * d, 0.0))

    pitch_sum = masked_sq_sum(pitch_p_ref, pitch_t_ref)
    energy_sum = masked_sq_sum(energy_p_ref, energy_t_ref)
    per_sum = masked_sq_sum(per_p_ref, per_t_ref)
    count = jnp.sum(valid.astype(f32))

    @pl.when(step == 0)
    def _init():
        for k in range(5):
            acc_ref[k] = f32(0.0)

    acc_ref[0] += ema_sum
    acc_ref[1] += per_sum
    acc_ref[2] += pitch_sum
    acc_ref[3] += energy_sum
    acc_ref[4] += count

    @pl.when(step == n_steps - 1)
    def _finalize():
        # duration loss: the src-length tensors fit one resident block (constant
        # index_map), so this is computed exactly once, in the finalize step.
        log_dur_t = jnp.log(dur_t_ref[...].astype(f32) + 1.0)
        dd = logdur_p_ref[...].astype(f32) - log_dur_t
        src_valid = src_mask_ref[...] == 0
        dur_sum = jnp.sum(jnp.where(src_valid, dd * dd, 0.0))
        src_count = jnp.sum(src_valid.astype(f32))

        # 2 divides instead of 5 (matches PyTorch masked_select semantics:
        # an all-padded batch still yields NaN/inf, same as mean of empty).
        inv_bn = 1.0 / acc_ref[4]
        inv_src = 1.0 / src_count

        ema_loss = acc_ref[0] * inv_bn * f32(1.0 / _D_EMA)
        per_loss = acc_ref[1] * inv_bn
        pitch_loss = acc_ref[2] * inv_bn
        energy_loss = acc_ref[3] * inv_bn
        dur_loss = dur_sum * inv_src

        out_ref[0] = ema_loss + dur_loss + pitch_loss + energy_loss + per_loss
        out_ref[1] = ema_loss
        out_ref[2] = per_loss
        out_ref[3] = pitch_loss
        out_ref[4] = energy_loss
        out_ref[5] = dur_loss


def _choose_tile(t_bn, t_ema, bn_tile):
    """Pick a bn-time tile satisfying the (8,128) BlockSpec rules.

    Returns (tile, need_ema_slice).  A wrapper-side ema slice (extra HBM copy)
    is only required in the tiny awkward case t_bn < 128 and t_bn % 8 != 0.
    """
    if t_bn <= bn_tile and (t_bn % 8 == 0 or t_ema == t_bn):
        return t_bn, False                       # single tile, no copy
    if t_bn >= 128:
        cap = max(128, (bn_tile // 128) * 128)   # lane-aligned cap
        return min(cap, (t_bn // 128) * 128), False
    return t_bn, (t_ema != t_bn)                 # tiny + unaligned: slice ema tgt


def fastspeech2_loss(targets, predictions, *, bn_tile=1024):
    """Mirrors FastSpeech2Loss.forward(targets, predictions).

    Returns a (6,) f32 array: [total, ema, periodicity, pitch, energy, duration]
    (same values/order as the PyTorch tuple; unpack if you need the tuple).
    """
    (ema_targets, pitch_targets, periodicity_targets,
     energy_targets, duration_targets) = targets
    (_, pitch_pred, energy_pred, log_duration_pred, _,
     periodicity_pred, ema_pred, src_masks, bn_masks, _, _) = predictions

    assert ema_targets.shape[2] == _D_EMA
    B, t_bn = bn_masks.shape
    t_src = src_masks.shape[1]
    t_ema = ema_targets.shape[1]

    bn_mask_i = bn_masks.astype(jnp.int32)
    src_mask_i = src_masks.astype(jnp.int32)

    tile, need_slice = _choose_tile(t_bn, t_ema, bn_tile)
    if need_slice:
        # Only hit for t_bn < 128 with an 8-unaligned length: tiny copy.
        ema_targets = ema_targets[:, :t_bn, :]

    grid = (pl.cdiv(t_bn, tile),)
    kernel = functools.partial(_fs2_loss_kernel, t_bn=t_bn)

    losses = pl.pallas_call(
        kernel,
        out_shape=jax.ShapeDtypeStruct((6,), jnp.float32),
        grid_spec=pltpu.PrefetchScalarGridSpec(
            num_scalar_prefetch=0,
            grid=grid,
            in_specs=[
                pl.BlockSpec((B, tile, _D_EMA), lambda i: (0, i, 0)),  # ema tgt
                pl.BlockSpec((B, tile, _D_EMA), lambda i: (0, i, 0)),  # ema pred
                pl.BlockSpec((B, tile), lambda i: (0, i)),             # pitch pred
                pl.BlockSpec((B, tile), lambda i: (0, i)),             # energy pred
                pl.BlockSpec((B, tile), lambda i: (0, i)),             # periodicity pred
                pl.BlockSpec((B, tile), lambda i: (0, i)),             # pitch tgt
                pl.BlockSpec((B, tile), lambda i: (0, i)),             # energy tgt
                pl.BlockSpec((B, tile), lambda i: (0, i)),             # periodicity tgt
                pl.BlockSpec((B, tile), lambda i: (0, i)),             # bn mask
                pl.BlockSpec((B, t_src), lambda i: (0, 0)),            # duration tgt
                pl.BlockSpec((B, t_src), lambda i: (0, 0)),            # log-dur pred
                pl.BlockSpec((B, t_src), lambda i: (0, 0)),            # src mask
            ],
            out_specs=pl.BlockSpec(memory_space=pltpu.MemorySpace.SMEM),
            scratch_shapes=[pltpu.SMEM((8,), jnp.float32)],
        ),
        compiler_params=pltpu.CompilerParams(
            dimension_semantics=("arbitrary",)),
    )(ema_targets, ema_pred,
      pitch_pred, energy_pred, periodicity_pred,
      pitch_targets, energy_targets, periodicity_targets,
      bn_mask_i,
      duration_targets, log_duration_pred, src_mask_i)

    return losses


def _reference(targets, predictions):
    """Plain-JAX reference of the PyTorch semantics (for verification)."""
    (ema_t, pitch_t, per_t, energy_t, dur_t) = targets
    (_, pitch_p, energy_p, logdur_p, _, per_p, ema_p, src_m, bn_m, _, _) = predictions
    src_v = (~src_m).astype(jnp.float32)
    bn_v = (~bn_m).astype(jnp.float32)
    ema_t = ema_t[:, :bn_m.shape[1], :]

    def mmse(p, t, v):
        p = p.astype(jnp.float32)
        t = t.astype(jnp.float32)
        return jnp.sum((p - t) ** 2 * v) / jnp.sum(v * jnp.ones_like(p))

    ema_l = mmse(ema_p, ema_t, bn_v[:, :, None])
    per_l = mmse(per_p, per_t, bn_v)
    pit_l = mmse(pitch_p, pitch_t, bn_v)
    ene_l = mmse(energy_p, energy_t, bn_v)
    dur_l = mmse(logdur_p, jnp.log(dur_t.astype(jnp.float32) + 1.0), src_v)
    return jnp.stack([ema_l + dur_l + pit_l + ene_l + per_l,
                      ema_l, per_l, pit_l, ene_l, dur_l])


if __name__ == "__main__":
    key = jax.random.PRNGKey(0)
    B, T_bn, T_src, T_ema, D = 2, 300, 24, 320, 12   # 300 -> partial last tile

    ks = jax.random.split(key, 10)
    ema_targets = jax.random.normal(ks[0], (B, T_ema, D), jnp.float32)
    pitch_targets = jax.random.normal(ks[1], (B, T_bn), jnp.float32)
    periodicity_targets = jax.random.normal(ks[2], (B, T_bn), jnp.float32)
    energy_targets = jax.random.normal(ks[3], (B, T_bn), jnp.float32)
    duration_targets = jax.random.randint(ks[4], (B, T_src), 1, 6).astype(jnp.int32)

    ema_pred = jax.random.normal(ks[5], (B, T_bn, D), jnp.float32)
    pitch_pred = jax.random.normal(ks[6], (B, T_bn), jnp.float32)
    periodicity_pred = jax.random.normal(ks[7], (B, T_bn), jnp.float32)
    energy_pred = jax.random.normal(ks[8], (B, T_bn), jnp.float32)
    log_duration_pred = jax.random.normal(ks[9], (B, T_src), jnp.float32)

    # padding masks (True = padded), as fed to the PyTorch module
    bn_lens = jnp.array([300, 220])
    src_lens = jnp.array([24, 17])
    bn_masks = jnp.arange(T_bn)[None, :] >= bn_lens[:, None]
    src_masks = jnp.arange(T_src)[None, :] >= src_lens[:, None]

    targets = (ema_targets, pitch_targets, periodicity_targets,
               energy_targets, duration_targets)
    dummy = jnp.zeros((1,), jnp.float32)
    predictions = (dummy, pitch_pred, energy_pred, log_duration_pred, dummy,
                   periodicity_pred, ema_pred, src_masks, bn_masks, dummy, dummy)

    ref = _reference(targets, predictions)

    # multi-tile path: tile=128, grid=3 (last tile partial, bounds-masked)
    losses = jax.block_until_ready(
        fastspeech2_loss(targets, predictions, bn_tile=128))
    assert jnp.allclose(losses, ref, rtol=1e-5, atol=1e-5), (losses, ref)

    # larger-tile path: tile=256, grid=2 (default-style sizing, no ema slice)
    losses_big = jax.block_until_ready(
        fastspeech2_loss(targets, predictions, bn_tile=1024))
    assert jnp.allclose(losses_big, ref, rtol=1e-5, atol=1e-5), (losses_big, ref)

    total, ema_l, per_l, pitch_l, energy_l, dur_l = losses  # PyTorch tuple order
    print("KERNEL_OK")
</pallas_src>

<mosaic_0001>
module attributes {stable_mosaic.version = 11 : i64} {
  func.func @_fs2_loss_kernel(%arg0: i32, %arg1: memref<2x128x12xf32, #tpu.memory_space<vmem>>, %arg2: memref<2x128x12xf32, #tpu.memory_space<vmem>>, %arg3: memref<2x128xf32, #tpu.memory_space<vmem>>, %arg4: memref<2x128xf32, #tpu.memory_space<vmem>>, %arg5: memref<2x128xf32, #tpu.memory_space<vmem>>, %arg6: memref<2x128xf32, #tpu.memory_space<vmem>>, %arg7: memref<2x128xf32, #tpu.memory_space<vmem>>, %arg8: memref<2x128xf32, #tpu.memory_space<vmem>>, %arg9: memref<2x128xi32, #tpu.memory_space<vmem>>, %arg10: memref<2x24xi32, #tpu.memory_space<vmem>>, %arg11: memref<2x24xf32, #tpu.memory_space<vmem>>, %arg12: memref<2x24xi32, #tpu.memory_space<vmem>>, %arg13: memref<6xf32, #tpu.memory_space<smem>>, %arg14: memref<8xf32, #tpu.memory_space<smem>>) attributes {dimension_semantics = [#tpu.dimension_semantics<arbitrary>], iteration_bounds = array<i64: 3>, scalar_prefetch = 0 : i64, scratch_operands = 1 : i64, tpu.core_type = #tpu.core_type<tc>, window_params = [{transform_indices = @transform_0, window_bounds = array<i64: 2, 128, 12>}, {transform_indices = @transform_1, window_bounds = array<i64: 2, 128, 12>}, {transform_indices = @transform_2, window_bounds = array<i64: 2, 128>}, {transform_indices = @transform_3, window_bounds = array<i64: 2, 128>}, {transform_indices = @transform_4, window_bounds = array<i64: 2, 128>}, {transform_indices = @transform_5, window_bounds = array<i64: 2, 128>}, {transform_indices = @transform_6, window_bounds = array<i64: 2, 128>}, {transform_indices = @transform_7, window_bounds = array<i64: 2, 128>}, {transform_indices = @transform_8, window_bounds = array<i64: 2, 128>}, {pipeline_mode = #tpu.pipeline_mode<synchronous>, transform_indices = @transform_9, window_bounds = array<i64: 2, 24>}, {pipeline_mode = #tpu.pipeline_mode<synchronous>, transform_indices = @transform_10, window_bounds = array<i64: 2, 24>}, {pipeline_mode = #tpu.pipeline_mode<synchronous>, transform_indices = @transform_11, window_bounds = array<i64: 2, 24>}, {transform_indices = @transform_12, window_bounds = array<i64: 6>}]} {
    %0 = tpu.iota {dimensions = array<i32: 1>} : vector<2x128xi32>
    %c128_i32 = arith.constant 128 : i32
    %1 = arith.muli %arg0, %c128_i32 : i32
    %2 = vector.broadcast %1 : i32 to vector<2x128xi32>
    %3 = arith.addi %2, %0 : vector<2x128xi32>
    %c300_i32 = arith.constant 300 : i32
    %4 = vector.broadcast %c300_i32 : i32 to vector<2x128xi32>
    %5 = arith.cmpi slt, %3, %4 : vector<2x128xi32>
    %c0 = arith.constant 0 : index
    %c0_0 = arith.constant 0 : index
    %6 = vector.load %arg9[%c0, %c0_0] : memref<2x128xi32, #tpu.memory_space<vmem>>, vector<2x128xi32>
    %c0_i32 = arith.constant 0 : i32
    %7 = vector.broadcast %c0_i32 : i32 to vector<2x128xi32>
    %8 = arith.cmpi eq, %6, %7 : vector<2x128xi32>
    %9 = arith.andi %5, %8 : vector<2x128xi1>
    %c0_1 = arith.constant 0 : index
    %c0_2 = arith.constant 0 : index
    %c0_3 = arith.constant 0 : index
    %10 = vector.load %arg2[%c0_1, %c0_2, %c0_3] : memref<2x128x12xf32, #tpu.memory_space<vmem>>, vector<2x128x12xf32>
    %c0_4 = arith.constant 0 : index
    %c0_5 = arith.constant 0 : index
    %c0_6 = arith.constant 0 : index
    %11 = vector.load %arg1[%c0_4, %c0_5, %c0_6] : memref<2x128x12xf32, #tpu.memory_space<vmem>>, vector<2x128x12xf32>
    %12 = arith.subf %10, %11 : vector<2x128x12xf32>
    %13 = arith.mulf %12, %12 : vector<2x128x12xf32>
    %cst = arith.constant dense<0.000000e+00> : vector<2x128xf32>
    %14 = vector.multi_reduction <add>, %13, %cst [2] : vector<2x128x12xf32> to vector<2x128xf32>
    %cst_7 = arith.constant 0.000000e+00 : f32
    %15 = vector.broadcast %cst_7 : f32 to vector<2x128xf32>
    %16 = arith.select %9, %14, %15 : vector<2x128xi1>, vector<2x128xf32>
    %17 = vector.shape_cast %16 : vector<2x128xf32> to vector<1x2x128xf32>
    %cst_8 = arith.constant dense<0.000000e+00> : vector<1xf32>
    %18 = vector.multi_reduction <add>, %17, %cst_8 [1, 2] : vector<1x2x128xf32> to vector<1xf32>
    %19 = vector.shape_cast %18 : vector<1xf32> to vector<1x1x1xf32>
    %20 = vector.extract %19[0, 0, 0] : f32 from vector<1x1x1xf32>
    %c0_9 = arith.constant 0 : index
    %c0_10 = arith.constant 0 : index
    %21 = vector.load %arg3[%c0_9, %c0_10] : memref<2x128xf32, #tpu.memory_space<vmem>>, vector<2x128xf32>
    %c0_11 = arith.constant 0 : index
    %c0_12 = arith.constant 0 : index
    %22 = vector.load %arg6[%c0_11, %c0_12] : memref<2x128xf32, #tpu.memory_space<vmem>>, vector<2x128xf32>
    %23 = arith.subf %21, %22 : vector<2x128xf32>
    %24 = arith.mulf %23, %23 : vector<2x128xf32>
    %cst_13 = arith.constant 0.000000e+00 : f32
    %25 = vector.broadcast %cst_13 : f32 to vector<2x128xf32>
    %26 = arith.select %9, %24, %25 : vector<2x128xi1>, vector<2x128xf32>
    %27 = vector.shape_cast %26 : vector<2x128xf32> to vector<1x2x128xf32>
    %cst_14 = arith.constant dense<0.000000e+00> : vector<1xf32>
    %28 = vector.multi_reduction <add>, %27, %cst_14 [1, 2] : vector<1x2x128xf32> to vector<1xf32>
    %29 = vector.shape_cast %28 : vector<1xf32> to vector<1x1x1xf32>
    %30 = vector.extract %29[0, 0, 0] : f32 from vector<1x1x1xf32>
    %c0_15 = arith.constant 0 : index
    %c0_16 = arith.constant 0 : index
    %31 = vector.load %arg4[%c0_15, %c0_16] : memref<2x128xf32, #tpu.memory_space<vmem>>, vector<2x128xf32>
    %c0_17 = arith.constant 0 : index
    %c0_18 = arith.constant 0 : index
    %32 = vector.load %arg7[%c0_17, %c0_18] : memref<2x128xf32, #tpu.memory_space<vmem>>, vector<2x128xf32>
    %33 = arith.subf %31, %32 : vector<2x128xf32>
    %34 = arith.mulf %33, %33 : vector<2x128xf32>
    %cst_19 = arith.constant 0.000000e+00 : f32
    %35 = vector.broadcast %cst_19 : f32 to vector<2x128xf32>
    %36 = arith.select %9, %34, %35 : vector<2x128xi1>, vector<2x128xf32>
    %37 = vector.shape_cast %36 : vector<2x128xf32> to vector<1x2x128xf32>
    %cst_20 = arith.constant dense<0.000000e+00> : vector<1xf32>
    %38 = vector.multi_reduction <add>, %37, %cst_20 [1, 2] : vector<1x2x128xf32> to vector<1xf32>
    %39 = vector.shape_cast %38 : vector<1xf32> to vector<1x1x1xf32>
    %40 = vector.extract %39[0, 0, 0] : f32 from vector<1x1x1xf32>
    %c0_21 = arith.constant 0 : index
    %c0_22 = arith.constant 0 : index
    %41 = vector.load %arg5[%c0_21, %c0_22] : memref<2x128xf32, #tpu.memory_space<vmem>>, vector<2x128xf32>
    %c0_23 = arith.constant 0 : index
    %c0_24 = arith.constant 0 : index
    %42 = vector.load %arg8[%c0_23, %c0_24] : memref<2x128xf32, #tpu.memory_space<vmem>>, vector<2x128xf32>
    %43 = arith.subf %41, %42 : vector<2x128xf32>
    %44 = arith.mulf %43, %43 : vector<2x128xf32>
    %cst_25 = arith.constant 0.000000e+00 : f32
    %45 = vector.broadcast %cst_25 : f32 to vector<2x128xf32>
    %46 = arith.select %9, %44, %45 : vector<2x128xi1>, vector<2x128xf32>
    %47 = vector.shape_cast %46 : vector<2x128xf32> to vector<1x2x128xf32>
    %cst_26 = arith.constant dense<0.000000e+00> : vector<1xf32>
    %48 = vector.multi_reduction <add>, %47, %cst_26 [1, 2] : vector<1x2x128xf32> to vector<1xf32>
    %49 = vector.shape_cast %48 : vector<1xf32> to vector<1x1x1xf32>
    %50 = vector.extract %49[0, 0, 0] : f32 from vector<1x1x1xf32>
    %51 = arith.extui %9 : vector<2x128xi1> to vector<2x128xi32>
    %52 = arith.sitofp %51 : vector<2x128xi32> to vector<2x128xf32>
    %53 = vector.shape_cast %52 : vector<2x128xf32> to vector<1x2x128xf32>
    %cst_27 = arith.constant dense<0.000000e+00> : vector<1xf32>
    %54 = vector.multi_reduction <add>, %53, %cst_27 [1, 2] : vector<1x2x128xf32> to vector<1xf32>
    %55 = vector.shape_cast %54 : vector<1xf32> to vector<1x1x1xf32>
    %56 = vector.extract %55[0, 0, 0] : f32 from vector<1x1x1xf32>
    %c0_i32_28 = arith.constant 0 : i32
    %57 = arith.cmpi eq, %arg0, %c0_i32_28 : i32
    %58 = arith.extui %57 : i1 to i32
    %c0_i32_29 = arith.constant 0 : i32
    %59 = arith.cmpi ne, %58, %c0_i32_29 : i32
    scf.if %59 {
      %cst_37 = arith.constant 0.000000e+00 : f32
      %c0_38 = arith.constant 0 : index
      %78 = memref.load %arg14[%c0_38] : memref<8xf32, #tpu.memory_space<smem>>
      memref.store %cst_37, %arg14[%c0_38] : memref<8xf32, #tpu.memory_space<smem>>
      %cst_39 = arith.constant 0.000000e+00 : f32
      %c1_40 = arith.constant 1 : index
      %79 = memref.load %arg14[%c1_40] : memref<8xf32, #tpu.memory_space<smem>>
      memref.store %cst_39, %arg14[%c1_40] : memref<8xf32, #tpu.memory_space<smem>>
      %cst_41 = arith.constant 0.000000e+00 : f32
      %c2_42 = arith.constant 2 : index
      %80 = memref.load %arg14[%c2_42] : memref<8xf32, #tpu.memory_space<smem>>
      memref.store %cst_41, %arg14[%c2_42] : memref<8xf32, #tpu.memory_space<smem>>
      %cst_43 = arith.constant 0.000000e+00 : f32
      %c3_44 = arith.constant 3 : index
      %81 = memref.load %arg14[%c3_44] : memref<8xf32, #tpu.memory_space<smem>>
      memref.store %cst_43, %arg14[%c3_44] : memref<8xf32, #tpu.memory_space<smem>>
      %cst_45 = arith.constant 0.000000e+00 : f32
      %c4_46 = arith.constant 4 : index
      %82 = memref.load %arg14[%c4_46] : memref<8xf32, #tpu.memory_space<smem>>
      memref.store %cst_45, %arg14[%c4_46] : memref<8xf32, #tpu.memory_space<smem>>
    } else {
    }
    %c0_30 = arith.constant 0 : index
    %60 = memref.load %arg14[%c0_30] : memref<8xf32, #tpu.memory_space<smem>>
    %61 = arith.addf %60, %20 : f32
    %c0_31 = arith.constant 0 : index
    %62 = memref.load %arg14[%c0_31] : memref<8xf32, #tpu.memory_space<smem>>
    memref.store %61, %arg14[%c0_31] : memref<8xf32, #tpu.memory_space<smem>>
    %c1 = arith.constant 1 : index
    %63 = memref.load %arg14[%c1] : memref<8xf32, #tpu.memory_space<smem>>
    %64 = arith.addf %63, %50 : f32
    %c1_32 = arith.constant 1 : index
    %65 = memref.load %arg14[%c1_32] : memref<8xf32, #tpu.memory_space<smem>>
    memref.store %64, %arg14[%c1_32] : memref<8xf32, #tpu.memory_space<smem>>
    %c2 = arith.constant 2 : index
    %66 = memref.load %arg14[%c2] : memref<8xf32, #tpu.memory_space<smem>>
    %67 = arith.addf %66, %30 : f32
    %c2_33 = arith.constant 2 : index
    %68 = memref.load %arg14[%c2_33] : memref<8xf32, #tpu.memory_space<smem>>
    memref.store %67, %arg14[%c2_33] : memref<8xf32, #tpu.memory_space<smem>>
    %c3 = arith.constant 3 : index
    %69 = memref.load %arg14[%c3] : memref<8xf32, #tpu.memory_space<smem>>
    %70 = arith.addf %69, %40 : f32
    %c3_34 = arith.constant 3 : index
    %71 = memref.load %arg14[%c3_34] : memref<8xf32, #tpu.memory_space<smem>>
    memref.store %70, %arg14[%c3_34] : memref<8xf32, #tpu.memory_space<smem>>
    %c4 = arith.constant 4 : index
    %72 = memref.load %arg14[%c4] : memref<8xf32, #tpu.memory_space<smem>>
    %73 = arith.addf %72, %56 : f32
    %c4_35 = arith.constant 4 : index
    %74 = memref.load %arg14[%c4_35] : memref<8xf32, #tpu.memory_space<smem>>
    memref.store %73, %arg14[%c4_35] : memref<8xf32, #tpu.memory_space<smem>>
    %c2_i32 = arith.constant 2 : i32
    %75 = arith.cmpi eq, %arg0, %c2_i32 : i32
    %76 = arith.extui %75 : i1 to i32
    %c0_i32_36 = arith.constant 0 : i32
    %77 = arith.cmpi ne, %76, %c0_i32_36 : i32
    scf.if %77 {
      %c0_37 = arith.constant 0 : index
      %c0_38 = arith.constant 0 : index
      %78 = vector.load %arg10[%c0_37, %c0_38] : memref<2x24xi32, #tpu.memory_space<vmem>>, vector<2x24xi32>
      %79 = arith.sitofp %78 : vector<2x24xi32> to vector<2x24xf32>
      %cst_39 = arith.constant 1.000000e+00 : f32
      %80 = vector.broadcast %cst_39 : f32 to vector<2x24xf32>
      %81 = arith.addf %79, %80 : vector<2x24xf32>
      %82 = math.log %81 : vector<2x24xf32>
      %c0_40 = arith.constant 0 : index
      %c0_41 = arith.constant 0 : index
      %83 = vector.load %arg11[%c0_40, %c0_41] : memref<2x24xf32, #tpu.memory_space<vmem>>, vector<2x24xf32>
      %84 = arith.subf %83, %82 : vector<2x24xf32>
      %c0_42 = arith.constant 0 : index
      %c0_43 = arith.constant 0 : index
      %85 = vector.load %arg12[%c0_42, %c0_43] : memref<2x24xi32, #tpu.memory_space<vmem>>, vector<2x24xi32>
      %c0_i32_44 = arith.constant 0 : i32
      %86 = vector.broadcast %c0_i32_44 : i32 to vector<2x24xi32>
      %87 = arith.cmpi eq, %85, %86 : vector<2x24xi32>
      %88 = arith.mulf %84, %84 : vector<2x24xf32>
      %cst_45 = arith.constant 0.000000e+00 : f32
      %89 = vector.broadcast %cst_45 : f32 to vector<2x24xf32>
      %90 = arith.select %87, %88, %89 : vector<2x24xi1>, vector<2x24xf32>
      %91 = vector.shape_cast %90 : vector<2x24xf32> to vector<1x2x24xf32>
      %cst_46 = arith.constant dense<0.000000e+00> : vector<1xf32>
      %92 = vector.multi_reduction <add>, %91, %cst_46 [1, 2] : vector<1x2x24xf32> to vector<1xf32>
      %93 = vector.shape_cast %92 : vector<1xf32> to vector<1x1x1xf32>
      %94 = vector.extract %93[0, 0, 0] : f32 from vector<1x1x1xf32>
      %95 = arith.extui %87 : vector<2x24xi1> to vector<2x24xi32>
      %96 = arith.sitofp %95 : vector<2x24xi32> to vector<2x24xf32>
      %97 = vector.shape_cast %96 : vector<2x24xf32> to vector<1x2x24xf32>
      %cst_47 = arith.constant dense<0.000000e+00> : vector<1xf32>
      %98 = vector.multi_reduction <add>, %97, %cst_47 [1, 2] : vector<1x2x24xf32> to vector<1xf32>
      %99 = vector.shape_cast %98 : vector<1xf32> to vector<1x1x1xf32>
      %100 = vector.extract %99[0, 0, 0] : f32 from vector<1x1x1xf32>
      %c4_48 = arith.constant 4 : index
      %101 = memref.load %arg14[%c4_48] : memref<8xf32, #tpu.memory_space<smem>>
      %cst_49 = arith.constant 1.000000e+00 : f32
      %102 = arith.divf %cst_49, %101 : f32
      %cst_50 = arith.constant 1.000000e+00 : f32
      %103 = arith.divf %cst_50, %100 : f32
      %c0_51 = arith.constant 0 : index
      %104 = memref.load %arg14[%c0_51] : memref<8xf32, #tpu.memory_space<smem>>
      %105 = arith.mulf %104, %102 : f32
      %cst_52 = arith.constant 0.0833333358 : f32
      %106 = arith.mulf %105, %cst_52 : f32
      %c1_53 = arith.constant 1 : index
      %107 = memref.load %arg14[%c1_53] : memref<8xf32, #tpu.memory_space<smem>>
      %108 = arith.mulf %107, %102 : f32
      %c2_54 = arith.constant 2 : index
      %109 = memref.load %arg14[%c2_54] : memref<8xf32, #tpu.memory_space<smem>>
      %110 = arith.mulf %109, %102 : f32
      %c3_55 = arith.constant 3 : index
      %111 = memref.load %arg14[%c3_55] : memref<8xf32, #tpu.memory_space<smem>>
      %112 = arith.mulf %111, %102 : f32
      %113 = arith.mulf %94, %103 : f32
      %114 = arith.addf %106, %113 : f32
      %115 = arith.addf %114, %110 : f32
      %116 = arith.addf %115, %112 : f32
      %117 = arith.addf %116, %108 : f32
      %c0_56 = arith.constant 0 : index
      %118 = memref.load %arg13[%c0_56] : memref<6xf32, #tpu.memory_space<smem>>
      memref.store %117, %arg13[%c0_56] : memref<6xf32, #tpu.memory_space<smem>>
      %c1_57 = arith.constant 1 : index
      %119 = memref.load %arg13[%c1_57] : memref<6xf32, #tpu.memory_space<smem>>
      memref.store %106, %arg13[%c1_57] : memref<6xf32, #tpu.memory_space<smem>>
      %c2_58 = arith.constant 2 : index
      %120 = memref.load %arg13[%c2_58] : memref<6xf32, #tpu.memory_space<smem>>
      memref.store %108, %arg13[%c2_58] : memref<6xf32, #tpu.memory_space<smem>>
      %c3_59 = arith.constant 3 : index
      %121 = memref.load %arg13[%c3_59] : memref<6xf32, #tpu.memory_space<smem>>
      memref.store %110, %arg13[%c3_59] : memref<6xf32, #tpu.memory_space<smem>>
      %c4_60 = arith.constant 4 : index
      %122 = memref.load %arg13[%c4_60] : memref<6xf32, #tpu.memory_space<smem>>
      memref.store %112, %arg13[%c4_60] : memref<6xf32, #tpu.memory_space<smem>>
      %c5 = arith.constant 5 : index
      %123 = memref.load %arg13[%c5] : memref<6xf32, #tpu.memory_space<smem>>
      memref.store %113, %arg13[%c5] : memref<6xf32, #tpu.memory_space<smem>>
    } else {
    }
    return
  }
  func.func @transform_0(%arg0: i32) -> (i32, i32, i32) {
    %c0_i32 = arith.constant 0 : i32
    %c0_i32_0 = arith.constant 0 : i32
    %c0_i32_1 = arith.constant 0 : i32
    return %c0_i32, %arg0, %c0_i32_0 : i32, i32, i32
  }
  func.func @transform_1(%arg0: i32) -> (i32, i32, i32) {
    %c0_i32 = arith.constant 0 : i32
    %c0_i32_0 = arith.constant 0 : i32
    %c0_i32_1 = arith.constant 0 : i32
    return %c0_i32, %arg0, %c0_i32_0 : i32, i32, i32
  }
  func.func @transform_2(%arg0: i32) -> (i32, i32) {
    %c0_i32 = arith.constant 0 : i32
    %c0_i32_0 = arith.constant 0 : i32
    return %c0_i32, %arg0 : i32, i32
  }
  func.func @transform_3(%arg0: i32) -> (i32, i32) {
    %c0_i32 = arith.constant 0 : i32
    %c0_i32_0 = arith.constant 0 : i32
    return %c0_i32, %arg0 : i32, i32
  }
  func.func @transform_4(%arg0: i32) -> (i32, i32) {
    %c0_i32 = arith.constant 0 : i32
    %c0_i32_0 = arith.constant 0 : i32
    return %c0_i32, %arg0 : i32, i32
  }
  func.func @transform_5(%arg0: i32) -> (i32, i32) {
    %c0_i32 = arith.constant 0 : i32
    %c0_i32_0 = arith.constant 0 : i32
    return %c0_i32, %arg0 : i32, i32
  }
  func.func @transform_6(%arg0: i32) -> (i32, i32) {
    %c0_i32 = arith.constant 0 : i32
    %c0_i32_0 = arith.constant 0 : i32
    return %c0_i32, %arg0 : i32, i32
  }
  func.func @transform_7(%arg0: i32) -> (i32, i32) {
    %c0_i32 = arith.constant 0 : i32
    %c0_i32_0 = arith.constant 0 : i32
    return %c0_i32, %arg0 : i32, i32
  }
  func.func @transform_8(%arg0: i32) -> (i32, i32) {
    %c0_i32 = arith.constant 0 : i32
    %c0_i32_0 = arith.constant 0 : i32
    return %c0_i32, %arg0 : i32, i32
  }
  func.func @transform_9(%arg0: i32) -> (i32, i32) {
    %c0_i32 = arith.constant 0 : i32
    %c0_i32_0 = arith.constant 0 : i32
    %c0_i32_1 = arith.constant 0 : i32
    return %c0_i32, %c0_i32_0 : i32, i32
  }
  func.func @transform_10(%arg0: i32) -> (i32, i32) {
    %c0_i32 = arith.constant 0 : i32
    %c0_i32_0 = arith.constant 0 : i32
    %c0_i32_1 = arith.constant 0 : i32
    return %c0_i32, %c0_i32_0 : i32, i32
  }
  func.func @transform_11(%arg0: i32) -> (i32, i32) {
    %c0_i32 = arith.constant 0 : i32
    %c0_i32_0 = arith.constant 0 : i32
    %c0_i32_1 = arith.constant 0 : i32
    return %c0_i32, %c0_i32_0 : i32, i32
  }
  func.func @transform_12(%arg0: i32) -> i32 {
    %c0_i32 = arith.constant 0 : i32
    %c0_i32_0 = arith.constant 0 : i32
    return %c0_i32 : i32
  }
}

</mosaic_0001>

<llo_original>
// kernel: tpu_custom_call.1
$region0: #{tpu_custom_call.1}
  #allocation0 [shape = 'u32[]', space=smem, size = 0x4, offset = 0x4, fixed_abs, tag = 'smem constant byte address 0x4 - core index']
  #allocation1 [shape = 'u32[144,128]{1,0:T(1,128)}', space=vmem, size = 0x12000, scoped, tag = 'internal scratch']
  #allocation2 [shape = 'f32[8]{0:T(128)}', space=smem, size = 0x200, scoped, tag = 'scratch operand']
  %s0 = inlined_call_operand.vmem [shape: f32[2,320,12], index: 0, kind: input, shape index: {}]
  %s1 = inlined_call_operand.vmem [shape: f32[2,300,12], index: 1, kind: input, shape index: {}]
  %s2 = inlined_call_operand.vmem [shape: f32[2,300], index: 2, kind: input, shape index: {}]
  %s3 = inlined_call_operand.vmem [shape: f32[2,300], index: 3, kind: input, shape index: {}]
  %s4 = inlined_call_operand.vmem [shape: f32[2,300], index: 4, kind: input, shape index: {}]
  %s5 = inlined_call_operand.vmem [shape: f32[2,300], index: 5, kind: input, shape index: {}]
  %s6 = inlined_call_operand.vmem [shape: f32[2,300], index: 6, kind: input, shape index: {}]
  %s7 = inlined_call_operand.vmem [shape: f32[2,300], index: 7, kind: input, shape index: {}]
  %s8 = inlined_call_operand.vmem [shape: s32[2,300], index: 8, kind: input, shape index: {}]
  %s9 = inlined_call_operand.vmem [shape: s32[2,24], index: 9, kind: input, shape index: {}]
  %s10 = inlined_call_operand.vmem [shape: f32[2,24], index: 10, kind: input, shape index: {}]
  %s11 = inlined_call_operand.vmem [shape: s32[2,24], index: 11, kind: input, shape index: {}]
  %s12 = inlined_call_operand.hbm [shape: f32[6], index: 12, kind: output, shape index: {}]
  %s13 = sld [smem:[#allocation0]]
  $region193: #{tpu_custom_call.1} parent=0
    _
  %s15 = ssub.s32 1, %s13
  %s16 = scalar_select 0, %s15, %s13
  $region1: #{tpu_custom_call.1} parent=0
    #allocation3 [shape = 'u8[262144]{0}', space=vmem, size = 0x40000, scoped, tag = 'input window, operand 0']
    #allocation4 [shape = 'u8[262144]{0}', space=vmem, size = 0x40000, scoped, tag = 'input window, operand 1']
    #allocation5 [shape = 'u8[512]{0}', space=smem, size = 0x200, scoped, tag = 'output window, operand 0, single buffered']
    #allocation6 [shape = 's32[2]{0}', space=sflag, size = 0x8, scoped, tag = 'scoped memory for tpu_custom_call.1']
    %17 = vsyncpa [#allocation6], 0
    loop: start=0, step=1, limit=5
    $region2: #{tpu_custom_call.1} parent=1 // loop_pre_header
      _
    $region3: #{tpu_custom_call.1} parent=1 // loop_header
      %s19 = sphi 0, %s23
      %p20 = scmp.ge.s32.totalorder %s19, 5
      %s29 = sphi 0, %s31
      %s32 = sphi 0, %s29
      %s33 = sphi 0, %s32
      %s49 = sphi 0, %s33
      %s55 = sphi 0, %s57
      %s58 = sphi 0, %s55
      %s59 = sphi 0, %s58
      %s75 = sphi 0, %s59
      %s81 = sphi 0, %s83
      %s84 = sphi 0, %s81
      %s85 = sphi 0, %s84
      %s101 = sphi 0, %s85
      %s107 = sphi 0, %s109
      %s110 = sphi 0, %s107
      %s111 = sphi 0, %s110
      %s127 = sphi 0, %s111
      %s133 = sphi 0, %s135
      %s136 = sphi 0, %s133
      %s137 = sphi 0, %s136
      %s153 = sphi 0, %s137
      %s159 = sphi 0, %s161
      %s162 = sphi 0, %s159
      %s163 = sphi 0, %s162
      %s179 = sphi 0, %s163
      %s185 = sphi 0, %s187
      %s188 = sphi 0, %s185
      %s189 = sphi 0, %s188
      %s205 = sphi 0, %s189
      %s211 = sphi 0, %s213
      %s214 = sphi 0, %s211
      %s215 = sphi 0, %s214
      %s231 = sphi 0, %s215
      %s237 = sphi 0, %s239
      %s240 = sphi 0, %s237
      %s241 = sphi 0, %s240
      %s257 = sphi 0, %s241
      %s261 = sphi 0, %s261
      %s263 = sphi 0, %s261
      %s264 = sphi 0, %s263
      %s278 = sphi 0, %s264
      %s282 = sphi 0, %s282
      %s284 = sphi 0, %s282
      %s285 = sphi 0, %s284
      %s299 = sphi 0, %s285
      %s303 = sphi 0, %s303
      %s305 = sphi 0, %s303
      %s306 = sphi 0, %s305
      %s320 = sphi 0, %s306
      %s324 = sphi 0, %s324
      %s326 = sphi 0, %s324
      %s327 = sphi 0, %s326
      %s341 = sphi 0, %s327
    $region4: #{tpu_custom_call.1} parent=1 // loop_header_branch
      %22 = sbr.rel (%p20) target = $region8
    $region5: #{tpu_custom_call.1} parent=1 // loop_body
      %s24 = ssub.s32 %s19, 1
      %s25 = ssub.s32 %s19, 2
      %s26 = sadd.s32 %s19, 1
      %s27 = ssub.s32 %s19, %s26
      %p28 = scmp.eq.s32.totalorder %s27, 0
      %s30 = sadd.s32 %s29, 1
      %s31 = scalar_select %p28, %s29, %s30
      %p34 = pneg %p28
      %p35 = scmp.eq.s32.totalorder %s19, 2
      %p36 = por %p34, %p35
      %p37 = scmp.ne.s32.totalorder %s29, %s32
      %p38 = scmp.eq.s32.totalorder %s19, 0
      %p39 = por %p37, %p38
      %p40 = scmp.ne.s32.totalorder %s29, %s32
      %p41 = scmp.eq.s32.totalorder %s24, 2
      %p42 = por %p40, %p41
      %p43 = scmp.ne.s32.totalorder %s32, %s33
      %p44 = scmp.eq.s32.totalorder %s24, 0
      %p45 = por %p43, %p44
      %p46 = scmp.ne.s32.totalorder %s32, %s33
      %p47 = scmp.eq.s32.totalorder %s25, 2
      %p48 = por %p46, %p47
      %p50 = scmp.ne.s32.totalorder %s33, %s49
      %p51 = scmp.eq.s32.totalorder %s25, 0
      %p52 = por %p50, %p51
      %s53 = ssub.s32 %s19, %s26
      %p54 = scmp.eq.s32.totalorder %s53, 0
      %s56 = sadd.s32 %s55, 1
      %s57 = scalar_select %p54, %s55, %s56
      %p60 = pneg %p54
      %p61 = scmp.eq.s32.totalorder %s19, 2
      %p62 = por %p60, %p61
      %p63 = scmp.ne.s32.totalorder %s55, %s58
      %p64 = scmp.eq.s32.totalorder %s19, 0
      %p65 = por %p63, %p64
      %p66 = scmp.ne.s32.totalorder %s55, %s58
      %p67 = scmp.eq.s32.totalorder %s24, 2
      %p68 = por %p66, %p67
      %p69 = scmp.ne.s32.totalorder %s58, %s59
      %p70 = scmp.eq.s32.totalorder %s24, 0
      %p71 = por %p69, %p70
      %p72 = scmp.ne.s32.totalorder %s58, %s59
      %p73 = scmp.eq.s32.totalorder %s25, 2
      %p74 = por %p72, %p73
      %p76 = scmp.ne.s32.totalorder %s59, %s75
      %p77 = scmp.eq.s32.totalorder %s25, 0
      %p78 = por %p76, %p77
      %s79 = ssub.s32 %s19, %s26
      %p80 = scmp.eq.s32.totalorder %s79, 0
      %s82 = sadd.s32 %s81, 1
      %s83 = scalar_select %p80, %s81, %s82
      %p86 = pneg %p80
      %p87 = scmp.eq.s32.totalorder %s19, 2
      %p88 = por %p86, %p87
      %p89 = scmp.ne.s32.totalorder %s81, %s84
      %p90 = scmp.eq.s32.totalorder %s19, 0
      %p91 = por %p89, %p90
      %p92 = scmp.ne.s32.totalorder %s81, %s84
      %p93 = scmp.eq.s32.totalorder %s24, 2
      %p94 = por %p92, %p93
      %p95 = scmp.ne.s32.totalorder %s84, %s85
      %p96 = scmp.eq.s32.totalorder %s24, 0
      %p97 = por %p95, %p96
      %p98 = scmp.ne.s32.totalorder %s84, %s85
      %p99 = scmp.eq.s32.totalorder %s25, 2
      %p100 = por %p98, %p99
      %p102 = scmp.ne.s32.totalorder %s85, %s101
      %p103 = scmp.eq.s32.totalorder %s25, 0
      %p104 = por %p102, %p103
      %s105 = ssub.s32 %s19, %s26
      %p106 = scmp.eq.s32.totalorder %s105, 0
      %s108 = sadd.s32 %s107, 1
      %s109 = scalar_select %p106, %s107, %s108
      %p112 = pneg %p106
      %p113 = scmp.eq.s32.totalorder %s19, 2
      %p114 = por %p112, %p113
      %p115 = scmp.ne.s32.totalorder %s107, %s110
      %p116 = scmp.eq.s32.totalorder %s19, 0
      %p117 = por %p115, %p116
      %p118 = scmp.ne.s32.totalorder %s107, %s110
      %p119 = scmp.eq.s32.totalorder %s24, 2
      %p120 = por %p118, %p119
      %p121 = scmp.ne.s32.totalorder %s110, %s111
      %p122 = scmp.eq.s32.totalorder %s24, 0
      %p123 = por %p121, %p122
      %p124 = scmp.ne.s32.totalorder %s110, %s111
      %p125 = scmp.eq.s32.totalorder %s25, 2
      %p126 = por %p124, %p125
      %p128 = scmp.ne.s32.totalorder %s111, %s127
      %p129 = scmp.eq.s32.totalorder %s25, 0
      %p130 = por %p128, %p129
      %s131 = ssub.s32 %s19, %s26
      %p132 = scmp.eq.s32.totalorder %s131, 0
      %s134 = sadd.s32 %s133, 1
      %s135 = scalar_select %p132, %s133, %s134
      %p138 = pneg %p132
      %p139 = scmp.eq.s32.totalorder %s19, 2
      %p140 = por %p138, %p139
      %p141 = scmp.ne.s32.totalorder %s133, %s136
      %p142 = scmp.eq.s32.totalorder %s19, 0
      %p143 = por %p141, %p142
      %p144 = scmp.ne.s32.totalorder %s133, %s136
      %p145 = scmp.eq.s32.totalorder %s24, 2
      %p146 = por %p144, %p145
      %p147 = scmp.ne.s32.totalorder %s136, %s137
      %p148 = scmp.eq.s32.totalorder %s24, 0
      %p149 = por %p147, %p148
      %p150 = scmp.ne.s32.totalorder %s136, %s137
      %p151 = scmp.eq.s32.totalorder %s25, 2
      %p152 = por %p150, %p151
      %p154 = scmp.ne.s32.totalorder %s137, %s153
      %p155 = scmp.eq.s32.totalorder %s25, 0
      %p156 = por %p154, %p155
      %s157 = ssub.s32 %s19, %s26
      %p158 = scmp.eq.s32.totalorder %s157, 0
      %s160 = sadd.s32 %s159, 1
      %s161 = scalar_select %p158, %s159, %s160
      %p164 = pneg %p158
      %p165 = scmp.eq.s32.totalorder %s19, 2
      %p166 = por %p164, %p165
      %p167 = scmp.ne.s32.totalorder %s159, %s162
      %p168 = scmp.eq.s32.totalorder %s19, 0
      %p169 = por %p167, %p168
      %p170 = scmp.ne.s32.totalorder %s159, %s162
      %p171 = scmp.eq.s32.totalorder %s24, 2
      %p172 = por %p170, %p171
      %p173 = scmp.ne.s32.totalorder %s162, %s163
      %p174 = scmp.eq.s32.totalorder %s24, 0
      %p175 = por %p173, %p174
      %p176 = scmp.ne.s32.totalorder %s162, %s163
      %p177 = scmp.eq.s32.totalorder %s25, 2
      %p178 = por %p176, %p177
      %p180 = scmp.ne.s32.totalorder %s163, %s179
      %p181 = scmp.eq.s32.totalorder %s25, 0
      %p182 = por %p180, %p181
      %s183 = ssub.s32 %s19, %s26
      %p184 = scmp.eq.s32.totalorder %s183, 0
      %s186 = sadd.s32 %s185, 1
      %s187 = scalar_select %p184, %s185, %s186
      %p190 = pneg %p184
      %p191 = scmp.eq.s32.totalorder %s19, 2
      %p192 = por %p190, %p191
      %p193 = scmp.ne.s32.totalorder %s185, %s188
      %p194 = scmp.eq.s32.totalorder %s19, 0
      %p195 = por %p193, %p194
      %p196 = scmp.ne.s32.totalorder %s185, %s188
      %p197 = scmp.eq.s32.totalorder %s24, 2
      %p198 = por %p196, %p197
      %p199 = scmp.ne.s32.totalorder %s188, %s189
      %p200 = scmp.eq.s32.totalorder %s24, 0
      %p201 = por %p199, %p200
      %p202 = scmp.ne.s32.totalorder %s188, %s189
      %p203 = scmp.eq.s32.totalorder %s25, 2
      %p204 = por %p202, %p203
      %p206 = scmp.ne.s32.totalorder %s189, %s205
      %p207 = scmp.eq.s32.totalorder %s25, 0
      %p208 = por %p206, %p207
      %s209 = ssub.s32 %s19, %s26
      %p210 = scmp.eq.s32.totalorder %s209, 0
      %s212 = sadd.s32 %s211, 1
      %s213 = scalar_select %p210, %s211, %s212
      %p216 = pneg %p210
      %p217 = scmp.eq.s32.totalorder %s19, 2
      %p218 = por %p216, %p217
      %p219 = scmp.ne.s32.totalorder %s211, %s214
      %p220 = scmp.eq.s32.totalorder %s19, 0
      %p221 = por %p219, %p220
      %p222 = scmp.ne.s32.totalorder %s211, %s214
      %p223 = scmp.eq.s32.totalorder %s24, 2
      %p224 = por %p222, %p223
      %p225 = scmp.ne.s32.totalorder %s214, %s215
      %p226 = scmp.eq.s32.totalorder %s24, 0
      %p227 = por %p225, %p226
      %p228 = scmp.ne.s32.totalorder %s214, %s215
      %p229 = scmp.eq.s32.totalorder %s25, 2
      %p230 = por %p228, %p229
      %p232 = scmp.ne.s32.totalorder %s215, %s231
      %p233 = scmp.eq.s32.totalorder %s25, 0
      %p234 = por %p232, %p233
      %s235 = ssub.s32 %s19, %s26
      %p236 = scmp.eq.s32.totalorder %s235, 0
      %s238 = sadd.s32 %s237, 1
      %s239 = scalar_select %p236, %s237, %s238
      %p242 = pneg %p236
      %p243 = scmp.eq.s32.totalorder %s19, 2
      %p244 = por %p242, %p243
      %p245 = scmp.ne.s32.totalorder %s237, %s240
      %p246 = scmp.eq.s32.totalorder %s19, 0
      %p247 = por %p245, %p246
      %p248 = scmp.ne.s32.totalorder %s237, %s240
      %p249 = scmp.eq.s32.totalorder %s24, 2
      %p250 = por %p248, %p249
      %p251 = scmp.ne.s32.totalorder %s240, %s241
      %p252 = scmp.eq.s32.totalorder %s24, 0
      %p253 = por %p251, %p252
      %p254 = scmp.ne.s32.totalorder %s240, %s241
      %p255 = scmp.eq.s32.totalorder %s25, 2
      %p256 = por %p254, %p255
      %p258 = scmp.ne.s32.totalorder %s241, %s257
      %p259 = scmp.eq.s32.totalorder %s25, 0
      %p260 = por %p258, %p259
      %s262 = sadd.s32 %s261, 1
      %p265 = scmp.eq.s32.totalorder %s19, 2
      %p266 = scmp.ne.s32.totalorder %s261, %s263
      %p267 = scmp.eq.s32.totalorder %s19, 0
      %p268 = por %p266, %p267
      %p269 = scmp.ne.s32.totalorder %s261, %s263
      %p270 = scmp.eq.s32.totalorder %s24, 2
      %p271 = por %p269, %p270
      %p272 = scmp.ne.s32.totalorder %s263, %s264
      %p273 = scmp.eq.s32.totalorder %s24, 0
      %p274 = por %p272, %p273
      %p275 = scmp.ne.s32.totalorder %s263, %s264
      %p276 = scmp.eq.s32.totalorder %s25, 2
      %p277 = por %p275, %p276
      %p279 = scmp.ne.s32.totalorder %s264, %s278
      %p280 = scmp.eq.s32.totalorder %s25, 0
      %p281 = por %p279, %p280
      %s283 = sadd.s32 %s282, 1
      %p286 = scmp.eq.s32.totalorder %s19, 2
      %p287 = scmp.ne.s32.totalorder %s282, %s284
      %p288 = scmp.eq.s32.totalorder %s19, 0
      %p289 = por %p287, %p288
      %p290 = scmp.ne.s32.totalorder %s282, %s284
      %p291 = scmp.eq.s32.totalorder %s24, 2
      %p292 = por %p290, %p291
      %p293 = scmp.ne.s32.totalorder %s284, %s285
      %p294 = scmp.eq.s32.totalorder %s24, 0
      %p295 = por %p293, %p294
      %p296 = scmp.ne.s32.totalorder %s284, %s285
      %p297 = scmp.eq.s32.totalorder %s25, 2
      %p298 = por %p296, %p297
      %p300 = scmp.ne.s32.totalorder %s285, %s299
      %p301 = scmp.eq.s32.totalorder %s25, 0
      %p302 = por %p300, %p301
      %s304 = sadd.s32 %s303, 1
      %p307 = scmp.eq.s32.totalorder %s19, 2
      %p308 = scmp.ne.s32.totalorder %s303, %s305
      %p309 = scmp.eq.s32.totalorder %s19, 0
      %p310 = por %p308, %p309
      %p311 = scmp.ne.s32.totalorder %s303, %s305
      %p312 = scmp.eq.s32.totalorder %s24, 2
      %p313 = por %p311, %p312
      %p314 = scmp.ne.s32.totalorder %s305, %s306
      %p315 = scmp.eq.s32.totalorder %s24, 0
      %p316 = por %p314, %p315
      %p317 = scmp.ne.s32.totalorder %s305, %s306
      %p318 = scmp.eq.s32.totalorder %s25, 2
      %p319 = por %p317, %p318
      %p321 = scmp.ne.s32.totalorder %s306, %s320
      %p322 = scmp.eq.s32.totalorder %s25, 0
      %p323 = por %p321, %p322
      %s325 = sadd.s32 %s324, 1
      %p328 = scmp.eq.s32.totalorder %s19, 2
      %p329 = scmp.ne.s32.totalorder %s324, %s326
      %p330 = scmp.eq.s32.totalorder %s19, 0
      %p331 = por %p329, %p330
      %p332 = scmp.ne.s32.totalorder %s324, %s326
      %p333 = scmp.eq.s32.totalorder %s24, 2
      %p334 = por %p332, %p333
      %p335 = scmp.ne.s32.totalorder %s326, %s327
      %p336 = scmp.eq.s32.totalorder %s24, 0
      %p337 = por %p335, %p336
      %p338 = scmp.ne.s32.totalorder %s326, %s327
      %p339 = scmp.eq.s32.totalorder %s25, 2
      %p340 = por %p338, %p339
      %p342 = scmp.ne.s32.totalorder %s327, %s341
      %p343 = scmp.eq.s32.totalorder %s25, 0
      %p344 = por %p342, %p343
      %p345 = scmp.le.s32.totalorder 1, %s19
      %p346 = scmp.lt.s32.totalorder %s19, 4
      %p347 = pnand %p345, %p346
      %p348 = pneg %p347
      // Predicated region
      $region9: #{tpu_custom_call.1} parent=5 // pred_check
        _
      $region10: #{tpu_custom_call.1} parent=5 // pred_check_branch
        %350 = sbr.rel (%p347) target = $region12
      $region11: #{tpu_custom_call.1} parent=5 // pred_region
        %s351 = ssub.s32 %s19, 1
        // Predicated region
        $region13: #{tpu_custom_call.1} parent=11 // pred_check
          %p352 = pneg %p274
        $region14: #{tpu_custom_call.1} parent=11 // pred_check_branch
          %354 = sbr.rel (%p352) target = $region16
        $region15: #{tpu_custom_call.1} parent=11 // pred_region
          _
        $region16: #{tpu_custom_call.1} parent=11 // pred_fallthru
          _
        // Predicated region
        $region17: #{tpu_custom_call.1} parent=11 // pred_check
          %p355 = pneg %p295
        $region18: #{tpu_custom_call.1} parent=11 // pred_check_branch
          %357 = sbr.rel (%p355) target = $region20
        $region19: #{tpu_custom_call.1} parent=11 // pred_region
          _
        $region20: #{tpu_custom_call.1} parent=11 // pred_fallthru
          _
        // Predicated region
        $region21: #{tpu_custom_call.1} parent=11 // pred_check
          %p358 = pneg %p316
        $region22: #{tpu_custom_call.1} parent=11 // pred_check_branch
          %360 = sbr.rel (%p358) target = $region24
        $region23: #{tpu_custom_call.1} parent=11 // pred_region
          _
        $region24: #{tpu_custom_call.1} parent=11 // pred_fallthru
          _
      $region12: #{tpu_custom_call.1} parent=5 // pred_fallthru
        _
      %p361 = scmp.lt.s32.totalorder %s19, 3
      // Predicated region
      $region25: #{tpu_custom_call.1} parent=5 // pred_check
        %p362 = pneg %p361
      $region26: #{tpu_custom_call.1} parent=5 // pred_check_branch
        %364 = sbr.rel (%p362) target = $region28
      $region27: #{tpu_custom_call.1} parent=5 // pred_region
        // Predicated region
        $region29: #{tpu_custom_call.1} parent=27 // pred_check
          %p365 = pneg %p39
        $region30: #{tpu_custom_call.1} parent=27 // pred_check_branch
          %367 = sbr.rel (%p365) target = $region32
        $region31: #{tpu_custom_call.1} parent=27 // pred_region
          %s368 = sand.u32 %s29, 1
          %s369 = sand.u32 %s29, 1
          %s370 = smul.addr %s369, 256
          %s371 = scalar_lea.vmem [#allocation3], %s370
          %s372 = smul.u32 16, %s19
          %s373 = ssub.s32 40, %s372
          %p374 = scmp.lt.s32.totalorder %s373, 16
          %s375 = scalar_select %p374, %s373, 16
          %s376 = smul.u32 256, %s375
          %p377 = scmp.ne.s32.totalorder 0, %s376
          %s378 = smul.addr %s372, 8
          %s379 = scalar_lea.vmem %s0, %s378
          // Predicated region
          $region33: #{tpu_custom_call.1} parent=31 // pred_check
            %p380 = pneg %p377
          $region34: #{tpu_custom_call.1} parent=31 // pred_check_branch
            %382 = sbr.rel (%p380) target = $region36
          $region35: #{tpu_custom_call.1} parent=31 // pred_region
            // Predicated region
            $region37: #{tpu_custom_call.1} parent=35 // pred_check
              _
            $region38: #{tpu_custom_call.1} parent=35 // pred_check_branch
              %384 = sbr.rel (0) target = $region40
            $region39: #{tpu_custom_call.1} parent=35 // pred_region
              // Predicated region
              $region59: #{tpu_custom_call.1} parent=39 // pred_check
                _
              $region60: #{tpu_custom_call.1} parent=39 // pred_check_branch
                %498 = sbr.rel (0) target = $region62
              $region61: #{tpu_custom_call.1} parent=39 // pred_region
                %s499 = sshrl.u32 %s375, 4
                // While loop
                $region63: #{tpu_custom_call.1} parent=61 // loop_pre_header
                  _
                $region64: #{tpu_custom_call.1} parent=61 // loop_header
                  %s501 = sphi 0, %s503
                  %p502 = scmp.ge.s32.totalorder %s501, %s499
                  %s506 = sphi 0, %s575
                  %s507 = sphi %s379, %s578
                  %s508 = sphi %s371, %s579
                $region65: #{tpu_custom_call.1} parent=61 // loop_header_branch
                  %505 = sbr.rel (%p502) target = $region69
                $region66: #{tpu_custom_call.1} parent=61 // loop_body
                  %v509 = vld [vmem:[%s507] sm:$0xff]
                  %510 = vst [vmem:[%s508] sm:$0xff] %v509
                  %v511 = vld [vmem:[%s507 + $0x8] sm:$0xff]
                  %512 = vst [vmem:[%s508 + $0x8] sm:$0xff] %v511
                  %v513 = vld [vmem:[%s507 + $0x10] sm:$0xff]
                  %514 = vst [vmem:[%s508 + $0x10] sm:$0xff] %v513
                  %v515 = vld [vmem:[%s507 + $0x18] sm:$0xff]
                  %516 = vst [vmem:[%s508 + $0x18] sm:$0xff] %v515
                  %v517 = vld [vmem:[%s507 + $0x20] sm:$0xff]
                  %518 = vst [vmem:[%s508 + $0x20] sm:$0xff] %v517
                  %v519 = vld [vmem:[%s507 + $0x28] sm:$0xff]
                  %520 = vst [vmem:[%s508 + $0x28] sm:$0xff] %v519
                  %v521 = vld [vmem:[%s507 + $0x30] sm:$0xff]
                  %522 = vst [vmem:[%s508 + $0x30] sm:$0xff] %v521
                  %v523 = vld [vmem:[%s507 + $0x38] sm:$0xff]
                  %524 = vst [vmem:[%s508 + $0x38] sm:$0xff] %v523
                  %v525 = vld [vmem:[%s507 + $0x40] sm:$0xff]
                  %526 = vst [vmem:[%s508 + $0x40] sm:$0xff] %v525
                  %v527 = vld [vmem:[%s507 + $0x48] sm:$0xff]
                  %528 = vst [vmem:[%s508 + $0x48] sm:$0xff] %v527
                  %v529 = vld [vmem:[%s507 + $0x50] sm:$0xff]
                  %530 = vst [vmem:[%s508 + $0x50] sm:$0xff] %v529
                  %v531 = vld [vmem:[%s507 + $0x58] sm:$0xff]
                  %532 = vst [vmem:[%s508 + $0x58] sm:$0xff] %v531
                  %v533 = vld [vmem:[%s507 + $0x60] sm:$0xff]
                  %534 = vst [vmem:[%s508 + $0x60] sm:$0xff] %v533
                  %v535 = vld [vmem:[%s507 + $0x68] sm:$0xff]
                  %536 = vst [vmem:[%s508 + $0x68] sm:$0xff] %v535
                  %v537 = vld [vmem:[%s507 + $0x70] sm:$0xff]
                  %538 = vst [vmem:[%s508 + $0x70] sm:$0xff] %v537
                  %v539 = vld [vmem:[%s507 + $0x78] sm:$0xff]
                  %540 = vst [vmem:[%s508 + $0x78] sm:$0xff] %v539
                  %v541 = vld [vmem:[%s507 + $0x140] sm:$0xff]
                  %542 = vst [vmem:[%s508 + $0x80] sm:$0xff] %v541
                  %v543 = vld [vmem:[%s507 + $0x148] sm:$0xff]
                  %544 = vst [vmem:[%s508 + $0x88] sm:$0xff] %v543
                  %v545 = vld [vmem:[%s507 + $0x150] sm:$0xff]
                  %546 = vst [vmem:[%s508 + $0x90] sm:$0xff] %v545
                  %v547 = vld [vmem:[%s507 + $0x158] sm:$0xff]
                  %548 = vst [vmem:[%s508 + $0x98] sm:$0xff] %v547
                  %v549 = vld [vmem:[%s507 + $0x160] sm:$0xff]
                  %550 = vst [vmem:[%s508 + $0xa0] sm:$0xff] %v549
                  %v551 = vld [vmem:[%s507 + $0x168] sm:$0xff]
                  %552 = vst [vmem:[%s508 + $0xa8] sm:$0xff] %v551
                  %v553 = vld [vmem:[%s507 + $0x170] sm:$0xff]
                  %554 = vst [vmem:[%s508 + $0xb0] sm:$0xff] %v553
                  %v555 = vld [vmem:[%s507 + $0x178] sm:$0xff]
                  %556 = vst [vmem:[%s508 + $0xb8] sm:$0xff] %v555
                  %v557 = vld [vmem:[%s507 + $0x180] sm:$0xff]
                  %558 = vst [vmem:[%s508 + $0xc0] sm:$0xff] %v557
                  %v559 = vld [vmem:[%s507 + $0x188] sm:$0xff]
                  %560 = vst [vmem:[%s508 + $0xc8] sm:$0xff] %v559
                  %v561 = vld [vmem:[%s507 + $0x190] sm:$0xff]
                  %562 = vst [vmem:[%s508 + $0xd0] sm:$0xff] %v561
                  %v563 = vld [vmem:[%s507 + $0x198] sm:$0xff]
                  %564 = vst [vmem:[%s508 + $0xd8] sm:$0xff] %v563
                  %v565 = vld [vmem:[%s507 + $0x1a0] sm:$0xff]
                  %566 = vst [vmem:[%s508 + $0xe0] sm:$0xff] %v565
                  %v567 = vld [vmem:[%s507 + $0x1a8] sm:$0xff]
                  %568 = vst [vmem:[%s508 + $0xe8] sm:$0xff] %v567
                  %v569 = vld [vmem:[%s507 + $0x1b0] sm:$0xff]
                  %570 = vst [vmem:[%s508 + $0xf0] sm:$0xff] %v569
                  %v571 = vld [vmem:[%s507 + $0x1b8] sm:$0xff]
                  %572 = vst [vmem:[%s508 + $0xf8] sm:$0xff] %v571
                  %s573 = sadd.s32 1, %s506
                  %p574 = scmp.ge.s32.totalorder %s573, %s499
                  %s575 = scalar_select %p574, 0, %s573
                  %s576 = smul.u32 %s575, 128
                  %s577 = smul.u32 %s575, 128
                  %s578 = scalar_lea.vmem %s379, %s576
                  %s579 = scalar_lea.vmem %s371, %s577 [#allocation3]
                $region67: #{tpu_custom_call.1} parent=61 // loop_footer
                  %s503 = sadd.s32 %s501, 1
                $region68: #{tpu_custom_call.1} parent=61 // loop_footer_branch
                  %500 = sbr.rel target = $region64
                $region69: #{tpu_custom_call.1} parent=61 // loop_exit
                  _
                %s580 = sshrl.u32 %s375, 4
                %s581 = sand.u32 %s375, 15
                %s582 = smul.u32 %s580, 16
                %s583 = smul.u32 8, %s582
                %s584 = scalar_lea.vmem %s379, %s583
                %s585 = smul.u32 8, %s582
                %s586 = scalar_lea.vmem %s371, %s585 [#allocation3]
                // While loop
                $region70: #{tpu_custom_call.1} parent=61 // loop_pre_header
                  _
                $region71: #{tpu_custom_call.1} parent=61 // loop_header
                  %s588 = sphi 0, %s590
                  %p589 = scmp.ge.s32.totalorder %s588, %s581
                  %s593 = sphi 0, %s602
                  %s594 = sphi %s584, %s605
                  %s595 = sphi %s586, %s606
                $region72: #{tpu_custom_call.1} parent=61 // loop_header_branch
                  %592 = sbr.rel (%p589) target = $region76
                $region73: #{tpu_custom_call.1} parent=61 // loop_body
                  %v596 = vld [vmem:[%s594] sm:$0xff]
                  %597 = vst [vmem:[%s595] sm:$0xff] %v596
                  %v598 = vld [vmem:[%s594 + $0x140] sm:$0xff]
                  %599 = vst [vmem:[%s595 + $0x80] sm:$0xff] %v598
                  %s600 = sadd.s32 1, %s593
                  %p601 = scmp.ge.s32.totalorder %s600, %s581
                  %s602 = scalar_select %p601, 0, %s600
                  %s603 = smul.u32 %s602, 8
                  %s604 = smul.u32 %s602, 8
                  %s605 = scalar_lea.vmem %s584, %s603
                  %s606 = scalar_lea.vmem %s586, %s604 [#allocation3]
                $region74: #{tpu_custom_call.1} parent=61 // loop_footer
                  %s590 = sadd.s32 %s588, 1
                $region75: #{tpu_custom_call.1} parent=61 // loop_footer_branch
                  %587 = sbr.rel target = $region71
                $region76: #{tpu_custom_call.1} parent=61 // loop_exit
                  _
              $region62: #{tpu_custom_call.1} parent=39 // pred_fallthru
                _
              // Predicated region
              $region77: #{tpu_custom_call.1} parent=39 // pred_check
                _
              $region78: #{tpu_custom_call.1} parent=39 // pred_check_branch
                %608 = sbr.rel target = $region80
              $region79: #{tpu_custom_call.1} parent=39 // pred_region
                _
              $region80: #{tpu_custom_call.1} parent=39 // pred_fallthru
                _
            $region40: #{tpu_custom_call.1} parent=35 // pred_fallthru
              _
            // Predicated region
            $region41: #{tpu_custom_call.1} parent=35 // pred_check
              _
            $region42: #{tpu_custom_call.1} parent=35 // pred_check_branch
              %386 = sbr.rel target = $region44
            $region43: #{tpu_custom_call.1} parent=35 // pred_region
              %s388 = ssub.s32 256, 1
              %s389 = sshrl.u32 %s375, 4
              // While loop
              $region45: #{tpu_custom_call.1} parent=43 // loop_pre_header
                _
              $region46: #{tpu_custom_call.1} parent=43 // loop_header
                %s391 = sphi 0, %s393
                %p392 = scmp.ge.s32.totalorder %s391, %s389
                %s396 = sphi 0, %s465
                %s397 = sphi %s379, %s468
                %s398 = sphi %s371, %s469
              $region47: #{tpu_custom_call.1} parent=43 // loop_header_branch
                %395 = sbr.rel (%p392) target = $region51
              $region48: #{tpu_custom_call.1} parent=43 // loop_body
                %v399 = vld [vmem:[%s397] sm:%s388]
                %400 = vst [vmem:[%s398] sm:%s388] %v399
                %v401 = vld [vmem:[%s397 + $0x8] sm:%s388]
                %402 = vst [vmem:[%s398 + $0x8] sm:%s388] %v401
                %v403 = vld [vmem:[%s397 + $0x10] sm:%s388]
                %404 = vst [vmem:[%s398 + $0x10] sm:%s388] %v403
                %v405 = vld [vmem:[%s397 + $0x18] sm:%s388]
                %406 = vst [vmem:[%s398 + $0x18] sm:%s388] %v405
                %v407 = vld [vmem:[%s397 + $0x20] sm:%s388]
                %408 = vst [vmem:[%s398 + $0x20] sm:%s388] %v407
                %v409 = vld [vmem:[%s397 + $0x28] sm:%s388]
                %410 = vst [vmem:[%s398 + $0x28] sm:%s388] %v409
                %v411 = vld [vmem:[%s397 + $0x30] sm:%s388]
                %412 = vst [vmem:[%s398 + $0x30] sm:%s388] %v411
                %v413 = vld [vmem:[%s397 + $0x38] sm:%s388]
                %414 = vst [vmem:[%s398 + $0x38] sm:%s388] %v413
                %v415 = vld [vmem:[%s397 + $0x40] sm:%s388]
                %416 = vst [vmem:[%s398 + $0x40] sm:%s388] %v415
                %v417 = vld [vmem:[%s397 + $0x48] sm:%s388]
                %418 = vst [vmem:[%s398 + $0x48] sm:%s388] %v417
                %v419 = vld [vmem:[%s397 + $0x50] sm:%s388]
                %420 = vst [vmem:[%s398 + $0x50] sm:%s388] %v419
                %v421 = vld [vmem:[%s397 + $0x58] sm:%s388]
                %422 = vst [vmem:[%s398 + $0x58] sm:%s388] %v421
                %v423 = vld [vmem:[%s397 + $0x60] sm:%s388]
                %424 = vst [vmem:[%s398 + $0x60] sm:%s388] %v423
                %v425 = vld [vmem:[%s397 + $0x68] sm:%s388]
                %426 = vst [vmem:[%s398 + $0x68] sm:%s388] %v425
                %v427 = vld [vmem:[%s397 + $0x70] sm:%s388]
                %428 = vst [vmem:[%s398 + $0x70] sm:%s388] %v427
                %v429 = vld [vmem:[%s397 + $0x78] sm:%s388]
                %430 = vst [vmem:[%s398 + $0x78] sm:%s388] %v429
                %v431 = vld [vmem:[%s397 + $0x140] sm:%s388]
                %432 = vst [vmem:[%s398 + $0x80] sm:%s388] %v431
                %v433 = vld [vmem:[%s397 + $0x148] sm:%s388]
                %434 = vst [vmem:[%s398 + $0x88] sm:%s388] %v433
                %v435 = vld [vmem:[%s397 + $0x150] sm:%s388]
                %436 = vst [vmem:[%s398 + $0x90] sm:%s388] %v435
                %v437 = vld [vmem:[%s397 + $0x158] sm:%s388]
                %438 = vst [vmem:[%s398 + $0x98] sm:%s388] %v437
                %v439 = vld [vmem:[%s397 + $0x160] sm:%s388]
                %440 = vst [vmem:[%s398 + $0xa0] sm:%s388] %v439
                %v441 = vld [vmem:[%s397 + $0x168] sm:%s388]
                %442 = vst [vmem:[%s398 + $0xa8] sm:%s388] %v441
                %v443 = vld [vmem:[%s397 + $0x170] sm:%s388]
                %444 = vst [vmem:[%s398 + $0xb0] sm:%s388] %v443
                %v445 = vld [vmem:[%s397 + $0x178] sm:%s388]
                %446 = vst [vmem:[%s398 + $0xb8] sm:%s388] %v445
                %v447 = vld [vmem:[%s397 + $0x180] sm:%s388]
                %448 = vst [vmem:[%s398 + $0xc0] sm:%s388] %v447
                %v449 = vld [vmem:[%s397 + $0x188] sm:%s388]
                %450 = vst [vmem:[%s398 + $0xc8] sm:%s388] %v449
                %v451 = vld [vmem:[%s397 + $0x190] sm:%s388]
                %452 = vst [vmem:[%s398 + $0xd0] sm:%s388] %v451
                %v453 = vld [vmem:[%s397 + $0x198] sm:%s388]
                %454 = vst [vmem:[%s398 + $0xd8] sm:%s388] %v453
                %v455 = vld [vmem:[%s397 + $0x1a0] sm:%s388]
                %456 = vst [vmem:[%s398 + $0xe0] sm:%s388] %v455
                %v457 = vld [vmem:[%s397 + $0x1a8] sm:%s388]
                %458 = vst [vmem:[%s398 + $0xe8] sm:%s388] %v457
                %v459 = vld [vmem:[%s397 + $0x1b0] sm:%s388]
                %460 = vst [vmem:[%s398 + $0xf0] sm:%s388] %v459
                %v461 = vld [vmem:[%s397 + $0x1b8] sm:%s388]
                %462 = vst [vmem:[%s398 + $0xf8] sm:%s388] %v461
                %s463 = sadd.s32 1, %s396
                %p464 = scmp.ge.s32.totalorder %s463, %s389
                %s465 = scalar_select %p464, 0, %s463
                %s466 = smul.u32 %s465, 128
                %s467 = smul.u32 %s465, 128
                %s468 = scalar_lea.vmem %s379, %s466
                %s469 = scalar_lea.vmem %s371, %s467 [#allocation3]
              $region49: #{tpu_custom_call.1} parent=43 // loop_footer
                %s393 = sadd.s32 %s391, 1
              $region50: #{tpu_custom_call.1} parent=43 // loop_footer_branch
                %390 = sbr.rel target = $region46
              $region51: #{tpu_custom_call.1} parent=43 // loop_exit
                _
              %s470 = sshrl.u32 %s375, 4
              %s471 = sand.u32 %s375, 15
              %s472 = smul.u32 %s470, 16
              %s473 = smul.u32 8, %s472
              %s474 = scalar_lea.vmem %s379, %s473
              %s475 = smul.u32 8, %s472
              %s476 = scalar_lea.vmem %s371, %s475 [#allocation3]
              // While loop
              $region52: #{tpu_custom_call.1} parent=43 // loop_pre_header
                _
              $region53: #{tpu_custom_call.1} parent=43 // loop_header
                %s478 = sphi 0, %s480
                %p479 = scmp.ge.s32.totalorder %s478, %s471
                %s483 = sphi 0, %s492
                %s484 = sphi %s474, %s495
                %s485 = sphi %s476, %s496
              $region54: #{tpu_custom_call.1} parent=43 // loop_header_branch
                %482 = sbr.rel (%p479) target = $region58
              $region55: #{tpu_custom_call.1} parent=43 // loop_body
                %v486 = vld [vmem:[%s484] sm:%s388]
                %487 = vst [vmem:[%s485] sm:%s388] %v486
                %v488 = vld [vmem:[%s484 + $0x140] sm:%s388]
                %489 = vst [vmem:[%s485 + $0x80] sm:%s388] %v488
                %s490 = sadd.s32 1, %s483
                %p491 = scmp.ge.s32.totalorder %s490, %s471
                %s492 = scalar_select %p491, 0, %s490
                %s493 = smul.u32 %s492, 8
                %s494 = smul.u32 %s492, 8
                %s495 = scalar_lea.vmem %s474, %s493
                %s496 = scalar_lea.vmem %s476, %s494 [#allocation3]
              $region56: #{tpu_custom_call.1} parent=43 // loop_footer
                %s480 = sadd.s32 %s478, 1
              $region57: #{tpu_custom_call.1} parent=43 // loop_footer_branch
                %477 = sbr.rel target = $region53
              $region58: #{tpu_custom_call.1} parent=43 // loop_exit
                _
            $region44: #{tpu_custom_call.1} parent=35 // pred_fallthru
              _
          $region36: #{tpu_custom_call.1} parent=31 // pred_fallthru
            _
          %609 = vnop
        $region32: #{tpu_custom_call.1} parent=27 // pred_fallthru
          _
        // Predicated region
        $region81: #{tpu_custom_call.1} parent=27 // pred_check
          %p610 = pneg %p65
        $region82: #{tpu_custom_call.1} parent=27 // pred_check_branch
          %612 = sbr.rel (%p610) target = $region84
        $region83: #{tpu_custom_call.1} parent=27 // pred_region
          %s613 = sand.u32 %s55, 1
          %s614 = sand.u32 %s55, 1
          %s615 = smul.addr %s614, 256
          %s616 = scalar_lea.vmem [#allocation4], %s615
          %s617 = smul.u32 16, %s19
          %s618 = ssub.s32 38, %s617
          %p619 = scmp.lt.s32.totalorder %s618, 16
          %s620 = scalar_select %p619, %s618, 16
          %s621 = smul.u32 256, %s620
          %p622 = scmp.ne.s32.totalorder 0, %s621
          %s623 = smul.addr %s617, 8
          %s624 = scalar_lea.vmem %s1, %s623
          // Predicated region
          $region85: #{tpu_custom_call.1} parent=83 // pred_check
            %p625 = pneg %p622
          $region86: #{tpu_custom_call.1} parent=83 // pred_check_branch
            %627 = sbr.rel (%p625) target = $region88
          $region87: #{tpu_custom_call.1} parent=83 // pred_region
            // Predicated region
            $region89: #{tpu_custom_call.1} parent=87 // pred_check
              _
            $region90: #{tpu_custom_call.1} parent=87 // pred_check_branch
              %629 = sbr.rel (0) target = $region92
            $region91: #{tpu_custom_call.1} parent=87 // pred_region
              // Predicated region
              $region111: #{tpu_custom_call.1} parent=91 // pred_check
                _
              $region112: #{tpu_custom_call.1} parent=91 // pred_check_branch
                %743 = sbr.rel (0) target = $region114
              $region113: #{tpu_custom_call.1} parent=91 // pred_region
                %s744 = sshrl.u32 %s620, 4
                // While loop
                $region115: #{tpu_custom_call.1} parent=113 // loop_pre_header
                  _
                $region116: #{tpu_custom_call.1} parent=113 // loop_header
                  %s746 = sphi 0, %s748
                  %p747 = scmp.ge.s32.totalorder %s746, %s744
                  %s751 = sphi 0, %s820
                  %s752 = sphi %s624, %s823
                  %s753 = sphi %s616, %s824
                $region117: #{tpu_custom_call.1} parent=113 // loop_header_branch
                  %750 = sbr.rel (%p747) target = $region121
                $region118: #{tpu_custom_call.1} parent=113 // loop_body
                  %v754 = vld [vmem:[%s752] sm:$0xff]
                  %755 = vst [vmem:[%s753] sm:$0xff] %v754
                  %v756 = vld [vmem:[%s752 + $0x8] sm:$0xff]
                  %757 = vst [vmem:[%s753 + $0x8] sm:$0xff] %v756
                  %v758 = vld [vmem:[%s752 + $0x10] sm:$0xff]
                  %759 = vst [vmem:[%s753 + $0x10] sm:$0xff] %v758
                  %v760 = vld [vmem:[%s752 + $0x18] sm:$0xff]
                  %761 = vst [vmem:[%s753 + $0x18] sm:$0xff] %v760
                  %v762 = vld [vmem:[%s752 + $0x20] sm:$0xff]
                  %763 = vst [vmem:[%s753 + $0x20] sm:$0xff] %v762
                  %v764 = vld [vmem:[%s752 + $0x28] sm:$0xff]
                  %765 = vst [vmem:[%s753 + $0x28] sm:$0xff] %v764
                  %v766 = vld [vmem:[%s752 + $0x30] sm:$0xff]
                  %767 = vst [vmem:[%s753 + $0x30] sm:$0xff] %v766
                  %v768 = vld [vmem:[%s752 + $0x38] sm:$0xff]
                  %769 = vst [vmem:[%s753 + $0x38] sm:$0xff] %v768
                  %v770 = vld [vmem:[%s752 + $0x40] sm:$0xff]
                  %771 = vst [vmem:[%s753 + $0x40] sm:$0xff] %v770
                  %v772 = vld [vmem:[%s752 + $0x48] sm:$0xff]
                  %773 = vst [vmem:[%s753 + $0x48] sm:$0xff] %v772
                  %v774 = vld [vmem:[%s752 + $0x50] sm:$0xff]
                  %775 = vst [vmem:[%s753 + $0x50] sm:$0xff] %v774
                  %v776 = vld [vmem:[%s752 + $0x58] sm:$0xff]
                  %777 = vst [vmem:[%s753 + $0x58] sm:$0xff] %v776
                  %v778 = vld [vmem:[%s752 + $0x60] sm:$0xff]
                  %779 = vst [vmem:[%s753 + $0x60] sm:$0xff] %v778
                  %v780 = vld [vmem:[%s752 + $0x68] sm:$0xff]
                  %781 = vst [vmem:[%s753 + $0x68] sm:$0xff] %v780
                  %v782 = vld [vmem:[%s752 + $0x70] sm:$0xff]
                  %783 = vst [vmem:[%s753 + $0x70] sm:$0xff] %v782
                  %v784 = vld [vmem:[%s752 + $0x78] sm:$0xff]
                  %785 = vst [vmem:[%s753 + $0x78] sm:$0xff] %v784
                  %v786 = vld [vmem:[%s752 + $0x130] sm:$0xff]
                  %787 = vst [vmem:[%s753 + $0x80] sm:$0xff] %v786
                  %v788 = vld [vmem:[%s752 + $0x138] sm:$0xff]
                  %789 = vst [vmem:[%s753 + $0x88] sm:$0xff] %v788
                  %v790 = vld [vmem:[%s752 + $0x140] sm:$0xff]
                  %791 = vst [vmem:[%s753 + $0x90] sm:$0xff] %v790
                  %v792 = vld [vmem:[%s752 + $0x148] sm:$0xff]
                  %793 = vst [vmem:[%s753 + $0x98] sm:$0xff] %v792
                  %v794 = vld [vmem:[%s752 + $0x150] sm:$0xff]
                  %795 = vst [vmem:[%s753 + $0xa0] sm:$0xff] %v794
                  %v796 = vld [vmem:[%s752 + $0x158] sm:$0xff]
                  %797 = vst [vmem:[%s753 + $0xa8] sm:$0xff] %v796
                  %v798 = vld [vmem:[%s752 + $0x160] sm:$0xff]
                  %799 = vst [vmem:[%s753 + $0xb0] sm:$0xff] %v798
                  %v800 = vld [vmem:[%s752 + $0x168] sm:$0xff]
                  %801 = vst [vmem:[%s753 + $0xb8] sm:$0xff] %v800
                  %v802 = vld [vmem:[%s752 + $0x170] sm:$0xff]
                  %803 = vst [vmem:[%s753 + $0xc0] sm:$0xff] %v802
                  %v804 = vld [vmem:[%s752 + $0x178] sm:$0xff]
                  %805 = vst [vmem:[%s753 + $0xc8] sm:$0xff] %v804
                  %v806 = vld [vmem:[%s752 + $0x180] sm:$0xff]
                  %807 = vst [vmem:[%s753 + $0xd0] sm:$0xff] %v806
                  %v808 = vld [vmem:[%s752 + $0x188] sm:$0xff]
                  %809 = vst [vmem:[%s753 + $0xd8] sm:$0xff] %v808
                  %v810 = vld [vmem:[%s752 + $0x190] sm:$0xff]
                  %811 = vst [vmem:[%s753 + $0xe0] sm:$0xff] %v810
                  %v812 = vld [vmem:[%s752 + $0x198] sm:$0xff]
                  %813 = vst [vmem:[%s753 + $0xe8] sm:$0xff] %v812
                  %v814 = vld [vmem:[%s752 + $0x1a0] sm:$0xff]
                  %815 = vst [vmem:[%s753 + $0xf0] sm:$0xff] %v814
                  %v816 = vld [vmem:[%s752 + $0x1a8] sm:$0xff]
                  %817 = vst [vmem:[%s753 + $0xf8] sm:$0xff] %v816
                  %s818 = sadd.s32 1, %s751
                  %p819 = scmp.ge.s32.totalorder %s818, %s744
                  %s820 = scalar_select %p819, 0, %s818
                  %s821 = smul.u32 %s820, 128
                  %s822 = smul.u32 %s820, 128
                  %s823 = scalar_lea.vmem %s624, %s821
                  %s824 = scalar_lea.vmem %s616, %s822 [#allocation4]
                $region119: #{tpu_custom_call.1} parent=113 // loop_footer
                  %s748 = sadd.s32 %s746, 1
                $region120: #{tpu_custom_call.1} parent=113 // loop_footer_branch
                  %745 = sbr.rel target = $region116
                $region121: #{tpu_custom_call.1} parent=113 // loop_exit
                  _
                %s825 = sshrl.u32 %s620, 4
                %s826 = sand.u32 %s620, 15
                %s827 = smul.u32 %s825, 16
                %s828 = smul.u32 8, %s827
                %s829 = scalar_lea.vmem %s624, %s828
                %s830 = smul.u32 8, %s827
                %s831 = scalar_lea.vmem %s616, %s830 [#allocation4]
                // While loop
                $region122: #{tpu_custom_call.1} parent=113 // loop_pre_header
                  _
                $region123: #{tpu_custom_call.1} parent=113 // loop_header
                  %s833 = sphi 0, %s835
                  %p834 = scmp.ge.s32.totalorder %s833, %s826
                  %s838 = sphi 0, %s847
                  %s839 = sphi %s829, %s850
                  %s840 = sphi %s831, %s851
                $region124: #{tpu_custom_call.1} parent=113 // loop_header_branch
                  %837 = sbr.rel (%p834) target = $region128
                $region125: #{tpu_custom_call.1} parent=113 // loop_body
                  %v841 = vld [vmem:[%s839] sm:$0xff]
                  %842 = vst [vmem:[%s840] sm:$0xff] %v841
                  %v843 = vld [vmem:[%s839 + $0x130] sm:$0xff]
                  %844 = vst [vmem:[%s840 + $0x80] sm:$0xff] %v843
                  %s845 = sadd.s32 1, %s838
                  %p846 = scmp.ge.s32.totalorder %s845, %s826
                  %s847 = scalar_select %p846, 0, %s845
                  %s848 = smul.u32 %s847, 8
                  %s849 = smul.u32 %s847, 8
                  %s850 = scalar_lea.vmem %s829, %s848
                  %s851 = scalar_lea.vmem %s831, %s849 [#allocation4]
                $region126: #{tpu_custom_call.1} parent=113 // loop_footer
                  %s835 = sadd.s32 %s833, 1
                $region127: #{tpu_custom_call.1} parent=113 // loop_footer_branch
                  %832 = sbr.rel target = $region123
                $region128: #{tpu_custom_call.1} parent=113 // loop_exit
                  _
              $region114: #{tpu_custom_call.1} parent=91 // pred_fallthru
                _
              // Predicated region
              $region129: #{tpu_custom_call.1} parent=91 // pred_check
                _
              $region130: #{tpu_custom_call.1} parent=91 // pred_check_branch
                %853 = sbr.rel target = $region132
              $region131: #{tpu_custom_call.1} parent=91 // pred_region
                _
              $region132: #{tpu_custom_call.1} parent=91 // pred_fallthru
                _
            $region92: #{tpu_custom_call.1} parent=87 // pred_fallthru
              _
            // Predicated region
            $region93: #{tpu_custom_call.1} parent=87 // pred_check
              _
            $region94: #{tpu_custom_call.1} parent=87 // pred_check_branch
              %631 = sbr.rel target = $region96
            $region95: #{tpu_custom_call.1} parent=87 // pred_region
              %s633 = ssub.s32 256, 1
              %s634 = sshrl.u32 %s620, 4
              // While loop
              $region97: #{tpu_custom_call.1} parent=95 // loop_pre_header
                _
              $region98: #{tpu_custom_call.1} parent=95 // loop_header
                %s636 = sphi 0, %s638
                %p637 = scmp.ge.s32.totalorder %s636, %s634
                %s641 = sphi 0, %s710
                %s642 = sphi %s624, %s713
                %s643 = sphi %s616, %s714
              $region99: #{tpu_custom_call.1} parent=95 // loop_header_branch
                %640 = sbr.rel (%p637) target = $region103
              $region100: #{tpu_custom_call.1} parent=95 // loop_body
                %v644 = vld [vmem:[%s642] sm:%s633]
                %645 = vst [vmem:[%s643] sm:%s633] %v644
                %v646 = vld [vmem:[%s642 + $0x8] sm:%s633]
                %647 = vst [vmem:[%s643 + $0x8] sm:%s633] %v646
                %v648 = vld [vmem:[%s642 + $0x10] sm:%s633]
                %649 = vst [vmem:[%s643 + $0x10] sm:%s633] %v648
                %v650 = vld [vmem:[%s642 + $0x18] sm:%s633]
                %651 = vst [vmem:[%s643 + $0x18] sm:%s633] %v650
                %v652 = vld [vmem:[%s642 + $0x20] sm:%s633]
                %653 = vst [vmem:[%s643 + $0x20] sm:%s633] %v652
                %v654 = vld [vmem:[%s642 + $0x28] sm:%s633]
                %655 = vst [vmem:[%s643 + $0x28] sm:%s633] %v654
                %v656 = vld [vmem:[%s642 + $0x30] sm:%s633]
                %657 = vst [vmem:[%s643 + $0x30] sm:%s633] %v656
                %v658 = vld [vmem:[%s642 + $0x38] sm:%s633]
                %659 = vst [vmem:[%s643 + $0x38] sm:%s633] %v658
                %v660 = vld [vmem:[%s642 + $0x40] sm:%s633]
                %661 = vst [vmem:[%s643 + $0x40] sm:%s633] %v660
                %v662 = vld [vmem:[%s642 + $0x48] sm:%s633]
                %663 = vst [vmem:[%s643 + $0x48] sm:%s633] %v662
                %v664 = vld [vmem:[%s642 + $0x50] sm:%s633]
                %665 = vst [vmem:[%s643 + $0x50] sm:%s633] %v664
                %v666 = vld [vmem:[%s642 + $0x58] sm:%s633]
                %667 = vst [vmem:[%s643 + $0x58] sm:%s633] %v666
                %v668 = vld [vmem:[%s642 + $0x60] sm:%s633]
                %669 = vst [vmem:[%s643 + $0x60] sm:%s633] %v668
                %v670 = vld [vmem:[%s642 + $0x68] sm:%s633]
                %671 = vst [vmem:[%s643 + $0x68] sm:%s633] %v670
                %v672 = vld [vmem:[%s642 + $0x70] sm:%s633]
                %673 = vst [vmem:[%s643 + $0x70] sm:%s633] %v672
                %v674 = vld [vmem:[%s642 + $0x78] sm:%s633]
                %675 = vst [vmem:[%s643 + $0x78] sm:%s633] %v674
                %v676 = vld [vmem:[%s642 + $0x130] sm:%s633]
                %677 = vst [vmem:[%s643 + $0x80] sm:%s633] %v676
                %v678 = vld [vmem:[%s642 + $0x138] sm:%s633]
                %679 = vst [vmem:[%s643 + $0x88] sm:%s633] %v678
                %v680 = vld [vmem:[%s642 + $0x140] sm:%s633]
                %681 = vst [vmem:[%s643 + $0x90] sm:%s633] %v680
                %v682 = vld [vmem:[%s642 + $0x148] sm:%s633]
                %683 = vst [vmem:[%s643 + $0x98] sm:%s633] %v682
                %v684 = vld [vmem:[%s642 + $0x150] sm:%s633]
                %685 = vst [vmem:[%s643 + $0xa0] sm:%s633] %v684
                %v686 = vld [vmem:[%s642 + $0x158] sm:%s633]
                %687 = vst [vmem:[%s643 + $0xa8] sm:%s633] %v686
                %v688 = vld [vmem:[%s642 + $0x160] sm:%s633]
                %689 = vst [vmem:[%s643 + $0xb0] sm:%s633] %v688
                %v690 = vld [vmem:[%s642 + $0x168] sm:%s633]
                %691 = vst [vmem:[%s643 + $0xb8] sm:%s633] %v690
                %v692 = vld [vmem:[%s642 + $0x170] sm:%s633]
                %693 = vst [vmem:[%s643 + $0xc0] sm:%s633] %v692
                %v694 = vld [vmem:[%s642 + $0x178] sm:%s633]
                %695 = vst [vmem:[%s643 + $0xc8] sm:%s633] %v694
                %v696 = vld [vmem:[%s642 + $0x180] sm:%s633]
                %697 = vst [vmem:[%s643 + $0xd0] sm:%s633] %v696
                %v698 = vld [vmem:[%s642 + $0x188] sm:%s633]
                %699 = vst [vmem:[%s643 + $0xd8] sm:%s633] %v698
                %v700 = vld [vmem:[%s642 + $0x190] sm:%s633]
                %701 = vst [vmem:[%s643 + $0xe0] sm:%s633] %v700
                %v702 = vld [vmem:[%s642 + $0x198] sm:%s633]
                %703 = vst [vmem:[%s643 + $0xe8] sm:%s633] %v702
                %v704 = vld [vmem:[%s642 + $0x1a0] sm:%s633]
                %705 = vst [vmem:[%s643 + $0xf0] sm:%s633] %v704
                %v706 = vld [vmem:[%s642 + $0x1a8] sm:%s633]
                %707 = vst [vmem:[%s643 + $0xf8] sm:%s633] %v706
                %s708 = sadd.s32 1, %s641
                %p709 = scmp.ge.s32.totalorder %s708, %s634
                %s710 = scalar_select %p709, 0, %s708
                %s711 = smul.u32 %s710, 128
                %s712 = smul.u32 %s710, 128
                %s713 = scalar_lea.vmem %s624, %s711
                %s714 = scalar_lea.vmem %s616, %s712 [#allocation4]
              $region101: #{tpu_custom_call.1} parent=95 // loop_footer
                %s638 = sadd.s32 %s636, 1
              $region102: #{tpu_custom_call.1} parent=95 // loop_footer_branch
                %635 = sbr.rel target = $region98
              $region103: #{tpu_custom_call.1} parent=95 // loop_exit
                _
              %s715 = sshrl.u32 %s620, 4
              %s716 = sand.u32 %s620, 15
              %s717 = smul.u32 %s715, 16
              %s718 = smul.u32 8, %s717
              %s719 = scalar_lea.vmem %s624, %s718
              %s720 = smul.u32 8, %s717
              %s721 = scalar_lea.vmem %s616, %s720 [#allocation4]
              // While loop
              $region104: #{tpu_custom_call.1} parent=95 // loop_pre_header
                _
              $region105: #{tpu_custom_call.1} parent=95 // loop_header
                %s723 = sphi 0, %s725
                %p724 = scmp.ge.s32.totalorder %s723, %s716
                %s728 = sphi 0, %s737
                %s729 = sphi %s719, %s740
                %s730 = sphi %s721, %s741
              $region106: #{tpu_custom_call.1} parent=95 // loop_header_branch
                %727 = sbr.rel (%p724) target = $region110
              $region107: #{tpu_custom_call.1} parent=95 // loop_body
                %v731 = vld [vmem:[%s729] sm:%s633]
                %732 = vst [vmem:[%s730] sm:%s633] %v731
                %v733 = vld [vmem:[%s729 + $0x130] sm:%s633]
                %734 = vst [vmem:[%s730 + $0x80] sm:%s633] %v733
                %s735 = sadd.s32 1, %s728
                %p736 = scmp.ge.s32.totalorder %s735, %s716
                %s737 = scalar_select %p736, 0, %s735
                %s738 = smul.u32 %s737, 8
                %s739 = smul.u32 %s737, 8
                %s740 = scalar_lea.vmem %s719, %s738
                %s741 = scalar_lea.vmem %s721, %s739 [#allocation4]
              $region108: #{tpu_custom_call.1} parent=95 // loop_footer
                %s725 = sadd.s32 %s723, 1
              $region109: #{tpu_custom_call.1} parent=95 // loop_footer_branch
                %722 = sbr.rel target = $region105
              $region110: #{tpu_custom_call.1} parent=95 // loop_exit
                _
            $region96: #{tpu_custom_call.1} parent=87 // pred_fallthru
              _
          $region88: #{tpu_custom_call.1} parent=83 // pred_fallthru
            _
          %854 = vnop
        $region84: #{tpu_custom_call.1} parent=27 // pred_fallthru
          _
        // Predicated region
        $region133: #{tpu_custom_call.1} parent=27 // pred_check
          %p855 = pneg %p91
        $region134: #{tpu_custom_call.1} parent=27 // pred_check_branch
          %857 = sbr.rel (%p855) target = $region136
        $region135: #{tpu_custom_call.1} parent=27 // pred_region
          %p858 = scmp.lt.s32.totalorder %s19, 2
          %s859 = scalar_select %p858, %s19, 2
          %s860 = smul.addr %s859, 2
          %s861 = scalar_lea.vmem %s2, %s860
        $region136: #{tpu_custom_call.1} parent=27 // pred_fallthru
          _
        // Predicated region
        $region137: #{tpu_custom_call.1} parent=27 // pred_check
          %p862 = pneg %p117
        $region138: #{tpu_custom_call.1} parent=27 // pred_check_branch
          %864 = sbr.rel (%p862) target = $region140
        $region139: #{tpu_custom_call.1} parent=27 // pred_region
          %p865 = scmp.lt.s32.totalorder %s19, 2
          %s866 = scalar_select %p865, %s19, 2
          %s867 = smul.addr %s866, 2
          %s868 = scalar_lea.vmem %s3, %s867
        $region140: #{tpu_custom_call.1} parent=27 // pred_fallthru
          _
        // Predicated region
        $region141: #{tpu_custom_call.1} parent=27 // pred_check
          %p869 = pneg %p143
        $region142: #{tpu_custom_call.1} parent=27 // pred_check_branch
          %871 = sbr.rel (%p869) target = $region144
        $region143: #{tpu_custom_call.1} parent=27 // pred_region
          %p872 = scmp.lt.s32.totalorder %s19, 2
          %s873 = scalar_select %p872, %s19, 2
          %s874 = smul.addr %s873, 2
          %s875 = scalar_lea.vmem %s4, %s874
        $region144: #{tpu_custom_call.1} parent=27 // pred_fallthru
          _
        // Predicated region
        $region145: #{tpu_custom_call.1} parent=27 // pred_check
          %p876 = pneg %p169
        $region146: #{tpu_custom_call.1} parent=27 // pred_check_branch
          %878 = sbr.rel (%p876) target = $region148
        $region147: #{tpu_custom_call.1} parent=27 // pred_region
          %p879 = scmp.lt.s32.totalorder %s19, 2
          %s880 = scalar_select %p879, %s19, 2
          %s881 = smul.addr %s880, 2
          %s882 = scalar_lea.vmem %s5, %s881
        $region148: #{tpu_custom_call.1} parent=27 // pred_fallthru
          _
        // Predicated region
        $region149: #{tpu_custom_call.1} parent=27 // pred_check
          %p883 = pneg %p195
        $region150: #{tpu_custom_call.1} parent=27 // pred_check_branch
          %885 = sbr.rel (%p883) target = $region152
        $region151: #{tpu_custom_call.1} parent=27 // pred_region
          %p886 = scmp.lt.s32.totalorder %s19, 2
          %s887 = scalar_select %p886, %s19, 2
          %s888 = smul.addr %s887, 2
          %s889 = scalar_lea.vmem %s6, %s888
        $region152: #{tpu_custom_call.1} parent=27 // pred_fallthru
          _
        // Predicated region
        $region153: #{tpu_custom_call.1} parent=27 // pred_check
          %p890 = pneg %p221
        $region154: #{tpu_custom_call.1} parent=27 // pred_check_branch
          %892 = sbr.rel (%p890) target = $region156
        $region155: #{tpu_custom_call.1} parent=27 // pred_region
          %p893 = scmp.lt.s32.totalorder %s19, 2
          %s894 = scalar_select %p893, %s19, 2
          %s895 = smul.addr %s894, 2
          %s896 = scalar_lea.vmem %s7, %s895
        $region156: #{tpu_custom_call.1} parent=27 // pred_fallthru
          _
        // Predicated region
        $region157: #{tpu_custom_call.1} parent=27 // pred_check
          %p897 = pneg %p247
        $region158: #{tpu_custom_call.1} parent=27 // pred_check_branch
          %899 = sbr.rel (%p897) target = $region160
        $region159: #{tpu_custom_call.1} parent=27 // pred_region
          %p900 = scmp.lt.s32.totalorder %s19, 2
          %s901 = scalar_select %p900, %s19, 2
          %s902 = smul.addr %s901, 2
          %s903 = scalar_lea.vmem %s8, %s902
        $region160: #{tpu_custom_call.1} parent=27 // pred_fallthru
          _
      $region28: #{tpu_custom_call.1} parent=5 // pred_fallthru
        _
      %p904 = scmp.le.s32.totalorder 1, %s19
      %p905 = scmp.lt.s32.totalorder %s19, 4
      %p906 = pnand %p904, %p905
      %p907 = pneg %p906
      // Predicated region
      $region161: #{tpu_custom_call.1} parent=5 // pred_check
        _
      $region162: #{tpu_custom_call.1} parent=5 // pred_check_branch
        %909 = sbr.rel (%p906) target = $region164
      $region163: #{tpu_custom_call.1} parent=5 // pred_region
        %s910 = ssub.s32 %s19, 1
        %s911 = sand.u32 %s32, 1
        %s912 = sand.u32 %s32, 1
        %s913 = smul.addr %s912, 256
        %s914 = scalar_lea.vmem [#allocation3], %s913
        // Predicated region
        $region165: #{tpu_custom_call.1} parent=163 // pred_check
          %p915 = pneg %p45
        $region166: #{tpu_custom_call.1} parent=163 // pred_check_branch
          %917 = sbr.rel (%p915) target = $region168
        $region167: #{tpu_custom_call.1} parent=163 // pred_region
          _
        $region168: #{tpu_custom_call.1} parent=163 // pred_fallthru
          _
        %s918 = sand.u32 %s58, 1
        %s919 = sand.u32 %s58, 1
        %s920 = smul.addr %s919, 256
        %s921 = scalar_lea.vmem [#allocation4], %s920
        // Predicated region
        $region169: #{tpu_custom_call.1} parent=163 // pred_check
          %p922 = pneg %p71
        $region170: #{tpu_custom_call.1} parent=163 // pred_check_branch
          %924 = sbr.rel (%p922) target = $region172
        $region171: #{tpu_custom_call.1} parent=163 // pred_region
          _
        $region172: #{tpu_custom_call.1} parent=163 // pred_fallthru
          _
        %s925 = sand.u32 %s32, 1
        %s926 = sand.u32 %s32, 1
        %s927 = smul.addr %s926, 256
        %s928 = scalar_lea.vmem [#allocation3], %s927
        %p929 = pneg %p45
        %p930 = pneg %p42
        %s931 = sand.u32 %s58, 1
        %s932 = sand.u32 %s58, 1
        %s933 = smul.addr %s932, 256
        %s934 = scalar_lea.vmem [#allocation4], %s933
        %p935 = pneg %p71
        %p936 = pneg %p68
        %p937 = scmp.lt.s32.totalorder %s24, 2
        %s938 = scalar_select %p937, %s24, 2
        %s939 = smul.addr %s938, 2
        %s940 = scalar_lea.vmem %s2, %s939
        %p941 = pneg %p97
        %p942 = pneg %p94
        %p943 = scmp.lt.s32.totalorder %s24, 2
        %s944 = scalar_select %p943, %s24, 2
        %s945 = smul.addr %s944, 2
        %s946 = scalar_lea.vmem %s3, %s945
        %p947 = pneg %p123
        %p948 = pneg %p120
        %p949 = scmp.lt.s32.totalorder %s24, 2
        %s950 = scalar_select %p949, %s24, 2
        %s951 = smul.addr %s950, 2
        %s952 = scalar_lea.vmem %s4, %s951
        %p953 = pneg %p149
        %p954 = pneg %p146
        %p955 = scmp.lt.s32.totalorder %s24, 2
        %s956 = scalar_select %p955, %s24, 2
        %s957 = smul.addr %s956, 2
        %s958 = scalar_lea.vmem %s5, %s957
        %p959 = pneg %p175
        %p960 = pneg %p172
        %p961 = scmp.lt.s32.totalorder %s24, 2
        %s962 = scalar_select %p961, %s24, 2
        %s963 = smul.addr %s962, 2
        %s964 = scalar_lea.vmem %s6, %s963
        %p965 = pneg %p201
        %p966 = pneg %p198
        %p967 = scmp.lt.s32.totalorder %s24, 2
        %s968 = scalar_select %p967, %s24, 2
        %s969 = smul.addr %s968, 2
        %s970 = scalar_lea.vmem %s7, %s969
        %p971 = pneg %p227
        %p972 = pneg %p224
        %p973 = scmp.lt.s32.totalorder %s24, 2
        %s974 = scalar_select %p973, %s24, 2
        %s975 = smul.addr %s974, 2
        %s976 = scalar_lea.vmem %s8, %s975
        %p977 = pneg %p253
        %p978 = pneg %p250
        %p979 = pneg %p274
        %p980 = pneg %p271
        %p981 = pneg %p295
        %p982 = pneg %p292
        %p983 = pneg %p316
        %p984 = pneg %p313
        %p985 = pneg %p337
        %p986 = pneg %p334
        %s987 = smul.u32 16, %s24
        %s988 = ssub.s32 40, %s987
        %p989 = scmp.lt.s32.totalorder %s988, 16
        %s990 = scalar_select %p989, %s988, 16
        %s991 = smul.u32 256, %s990
        %s992 = smul.u32 16, %s24
        %s993 = ssub.s32 38, %s992
        %p994 = scmp.lt.s32.totalorder %s993, 16
        %s995 = scalar_select %p994, %s993, 16
        %s996 = smul.u32 256, %s995
        %p997 = scmp.lt.s32.totalorder %s24, 2
        %s998 = scalar_select %p997, %s24, 2
        %s999 = smul.addr %s998, 2
        %s1000 = scalar_lea.vmem %s2, %s999
        %p1001 = scmp.lt.s32.totalorder %s24, 2
        %s1002 = scalar_select %p1001, %s24, 2
        %s1003 = smul.addr %s1002, 2
        %s1004 = scalar_lea.vmem %s3, %s1003
        %p1005 = scmp.lt.s32.totalorder %s24, 2
        %s1006 = scalar_select %p1005, %s24, 2
        %s1007 = smul.addr %s1006, 2
        %s1008 = scalar_lea.vmem %s4, %s1007
        %p1009 = scmp.lt.s32.totalorder %s24, 2
        %s1010 = scalar_select %p1009, %s24, 2
        %s1011 = smul.addr %s1010, 2
        %s1012 = scalar_lea.vmem %s5, %s1011
        %p1013 = scmp.lt.s32.totalorder %s24, 2
        %s1014 = scalar_select %p1013, %s24, 2
        %s1015 = smul.addr %s1014, 2
        %s1016 = scalar_lea.vmem %s6, %s1015
        %p1017 = scmp.lt.s32.totalorder %s24, 2
        %s1018 = scalar_select %p1017, %s24, 2
        %s1019 = smul.addr %s1018, 2
        %s1020 = scalar_lea.vmem %s7, %s1019
        %p1021 = scmp.lt.s32.totalorder %s24, 2
        %s1022 = scalar_select %p1021, %s24, 2
        %s1023 = smul.addr %s1022, 2
        %s1024 = scalar_lea.vmem %s8, %s1023
        %v1025 = vlaneseq
        %v1026 = vand.u32 %v1025, 127
        %s1027 = smul.u32 %s24, 128
        %v1028 = vstv %s1027
        %v1029 = vadd.s32 %v1028, %v1026
        %vm1030 = vcmp.lt.s32.totalorder %v1029, 300
        %v1031 = vld [vmem:[%s1024] sm:$0x3]
        %vm1032 = vcmp.eq.s32.totalorder %v1031, 0
        %vm1033 = vmand %vm1030, %vm1032
        %v1034 = vld [vmem:[%s921] sm:$0xff]
        %v1035 = vld [vmem:[%s921 + $0x8] sm:$0xff]
        %v1036 = vld [vmem:[%s921 + $0x10] sm:$0xff]
        %v1037 = vld [vmem:[%s921 + $0x18] sm:$0xff]
        %v1038 = vld [vmem:[%s921 + $0x20] sm:$0xff]
        %v1039 = vld [vmem:[%s921 + $0x28] sm:$0xff]
        %v1040 = vld [vmem:[%s921 + $0x30] sm:$0xff]
        %v1041 = vld [vmem:[%s921 + $0x38] sm:$0xff]
        %v1042 = vld [vmem:[%s921 + $0x40] sm:$0xff]
        %v1043 = vld [vmem:[%s921 + $0x48] sm:$0xff]
        %v1044 = vld [vmem:[%s921 + $0x50] sm:$0xff]
        %v1045 = vld [vmem:[%s921 + $0x58] sm:$0xff]
        %v1046 = vld [vmem:[%s921 + $0x60] sm:$0xff]
        %v1047 = vld [vmem:[%s921 + $0x68] sm:$0xff]
        %v1048 = vld [vmem:[%s921 + $0x70] sm:$0xff]
        %v1049 = vld [vmem:[%s921 + $0x78] sm:$0xff]
        %v1050 = vld [vmem:[%s921 + $0x80] sm:$0xff]
        %v1051 = vld [vmem:[%s921 + $0x88] sm:$0xff]
        %v1052 = vld [vmem:[%s921 + $0x90] sm:$0xff]
        %v1053 = vld [vmem:[%s921 + $0x98] sm:$0xff]
        %v1054 = vld [vmem:[%s921 + $0xa0] sm:$0xff]
        %v1055 = vld [vmem:[%s921 + $0xa8] sm:$0xff]
        %v1056 = vld [vmem:[%s921 + $0xb0] sm:$0xff]
        %v1057 = vld [vmem:[%s921 + $0xb8] sm:$0xff]
        %v1058 = vld [vmem:[%s921 + $0xc0] sm:$0xff]
        %v1059 = vld [vmem:[%s921 + $0xc8] sm:$0xff]
        %v1060 = vld [vmem:[%s921 + $0xd0] sm:$0xff]
        %v1061 = vld [vmem:[%s921 + $0xd8] sm:$0xff]
        %v1062 = vld [vmem:[%s921 + $0xe0] sm:$0xff]
        %v1063 = vld [vmem:[%s921 + $0xe8] sm:$0xff]
        %v1064 = vld [vmem:[%s921 + $0xf0] sm:$0xff]
        %v1065 = vld [vmem:[%s921 + $0xf8] sm:$0xff]
        %v1066 = vld [vmem:[%s914] sm:$0xff]
        %v1067 = vld [vmem:[%s914 + $0x8] sm:$0xff]
        %v1068 = vld [vmem:[%s914 + $0x10] sm:$0xff]
        %v1069 = vld [vmem:[%s914 + $0x18] sm:$0xff]
        %v1070 = vld [vmem:[%s914 + $0x20] sm:$0xff]
        %v1071 = vld [vmem:[%s914 + $0x28] sm:$0xff]
        %v1072 = vld [vmem:[%s914 + $0x30] sm:$0xff]
        %v1073 = vld [vmem:[%s914 + $0x38] sm:$0xff]
        %v1074 = vld [vmem:[%s914 + $0x40] sm:$0xff]
        %v1075 = vld [vmem:[%s914 + $0x48] sm:$0xff]
        %v1076 = vld [vmem:[%s914 + $0x50] sm:$0xff]
        %v1077 = vld [vmem:[%s914 + $0x58] sm:$0xff]
        %v1078 = vld [vmem:[%s914 + $0x60] sm:$0xff]
        %v1079 = vld [vmem:[%s914 + $0x68] sm:$0xff]
        %v1080 = vld [vmem:[%s914 + $0x70] sm:$0xff]
        %v1081 = vld [vmem:[%s914 + $0x78] sm:$0xff]
        %v1082 = vld [vmem:[%s914 + $0x80] sm:$0xff]
        %v1083 = vld [vmem:[%s914 + $0x88] sm:$0xff]
        %v1084 = vld [vmem:[%s914 + $0x90] sm:$0xff]
        %v1085 = vld [vmem:[%s914 + $0x98] sm:$0xff]
        %v1086 = vld [vmem:[%s914 + $0xa0] sm:$0xff]
        %v1087 = vld [vmem:[%s914 + $0xa8] sm:$0xff]
        %v1088 = vld [vmem:[%s914 + $0xb0] sm:$0xff]
        %v1089 = vld [vmem:[%s914 + $0xb8] sm:$0xff]
        %v1090 = vld [vmem:[%s914 + $0xc0] sm:$0xff]
        %v1091 = vld [vmem:[%s914 + $0xc8] sm:$0xff]
        %v1092 = vld [vmem:[%s914 + $0xd0] sm:$0xff]
        %v1093 = vld [vmem:[%s914 + $0xd8] sm:$0xff]
        %v1094 = vld [vmem:[%s914 + $0xe0] sm:$0xff]
        %v1095 = vld [vmem:[%s914 + $0xe8] sm:$0xff]
        %v1096 = vld [vmem:[%s914 + $0xf0] sm:$0xff]
        %v1097 = vld [vmem:[%s914 + $0xf8] sm:$0xff]
        %v1098 = vsub.f32 %v1034, %v1066
        %v1099 = vsub.f32 %v1035, %v1067
        %v1100 = vsub.f32 %v1036, %v1068
        %v1101 = vsub.f32 %v1037, %v1069
        %v1102 = vsub.f32 %v1038, %v1070
        %v1103 = vsub.f32 %v1039, %v1071
        %v1104 = vsub.f32 %v1040, %v1072
        %v1105 = vsub.f32 %v1041, %v1073
        %v1106 = vsub.f32 %v1042, %v1074
        %v1107 = vsub.f32 %v1043, %v1075
        %v1108 = vsub.f32 %v1044, %v1076
        %v1109 = vsub.f32 %v1045, %v1077
        %v1110 = vsub.f32 %v1046, %v1078
        %v1111 = vsub.f32 %v1047, %v1079
        %v1112 = vsub.f32 %v1048, %v1080
        %v1113 = vsub.f32 %v1049, %v1081
        %v1114 = vsub.f32 %v1050, %v1082
        %v1115 = vsub.f32 %v1051, %v1083
        %v1116 = vsub.f32 %v1052, %v1084
        %v1117 = vsub.f32 %v1053, %v1085
        %v1118 = vsub.f32 %v1054, %v1086
        %v1119 = vsub.f32 %v1055, %v1087
        %v1120 = vsub.f32 %v1056, %v1088
        %v1121 = vsub.f32 %v1057, %v1089
        %v1122 = vsub.f32 %v1058, %v1090
        %v1123 = vsub.f32 %v1059, %v1091
        %v1124 = vsub.f32 %v1060, %v1092
        %v1125 = vsub.f32 %v1061, %v1093
        %v1126 = vsub.f32 %v1062, %v1094
        %v1127 = vsub.f32 %v1063, %v1095
        %v1128 = vsub.f32 %v1064, %v1096
        %v1129 = vsub.f32 %v1065, %v1097
        %v1130 = vmul.f32 %v1098, %v1098
        %v1131 = vmul.f32 %v1099, %v1099
        %v1132 = vmul.f32 %v1100, %v1100
        %v1133 = vmul.f32 %v1101, %v1101
        %v1134 = vmul.f32 %v1102, %v1102
        %v1135 = vmul.f32 %v1103, %v1103
        %v1136 = vmul.f32 %v1104, %v1104
        %v1137 = vmul.f32 %v1105, %v1105
        %v1138 = vmul.f32 %v1106, %v1106
        %v1139 = vmul.f32 %v1107, %v1107
        %v1140 = vmul.f32 %v1108, %v1108
        %v1141 = vmul.f32 %v1109, %v1109
        %v1142 = vmul.f32 %v1110, %v1110
        %v1143 = vmul.f32 %v1111, %v1111
        %v1144 = vmul.f32 %v1112, %v1112
        %v1145 = vmul.f32 %v1113, %v1113
        %v1146 = vmul.f32 %v1114, %v1114
        %v1147 = vmul.f32 %v1115, %v1115
        %v1148 = vmul.f32 %v1116, %v1116
        %v1149 = vmul.f32 %v1117, %v1117
        %v1150 = vmul.f32 %v1118, %v1118
        %v1151 = vmul.f32 %v1119, %v1119
        %v1152 = vmul.f32 %v1120, %v1120
        %v1153 = vmul.f32 %v1121, %v1121
        %v1154 = vmul.f32 %v1122, %v1122
        %v1155 = vmul.f32 %v1123, %v1123
        %v1156 = vmul.f32 %v1124, %v1124
        %v1157 = vmul.f32 %v1125, %v1125
        %v1158 = vmul.f32 %v1126, %v1126
        %v1159 = vmul.f32 %v1127, %v1127
        %v1160 = vmul.f32 %v1128, %v1128
        %v1161 = vmul.f32 %v1129, %v1129
        %vm1162 = vcmask 97280
        %v1163 = vsel %vm1162, %v1130, 0.0
        %1164 = vadd.xlane.f32.xlu0 %v1163
        %v1165 = vpop.xlane.xlu0 %1164
        %v1166 = vsel %vm1162, %v1131, 0.0
        %1167 = vadd.xlane.f32.xlu0 %v1166
        %v1168 = vpop.xlane.xlu0 %1167
        %v1169 = vsel %vm1162, %v1132, 0.0
        %1170 = vadd.xlane.f32.xlu0 %v1169
        %v1171 = vpop.xlane.xlu0 %1170
        %v1172 = vsel %vm1162, %v1133, 0.0
        %1173 = vadd.xlane.f32.xlu0 %v1172
        %v1174 = vpop.xlane.xlu0 %1173
        %v1175 = vsel %vm1162, %v1134, 0.0
        %1176 = vadd.xlane.f32.xlu0 %v1175
        %v1177 = vpop.xlane.xlu0 %1176
        %v1178 = vsel %vm1162, %v1135, 0.0
        %1179 = vadd.xlane.f32.xlu0 %v1178
        %v1180 = vpop.xlane.xlu0 %1179
        %v1181 = vsel %vm1162, %v1136, 0.0
        %1182 = vadd.xlane.f32.xlu0 %v1181
        %v1183 = vpop.xlane.xlu0 %1182
        %v1184 = vsel %vm1162, %v1137, 0.0
        %1185 = vadd.xlane.f32.xlu0 %v1184
        %v1186 = vpop.xlane.xlu0 %1185
        %v1187 = vsel %vm1162, %v1138, 0.0
        %1188 = vadd.xlane.f32.xlu0 %v1187
        %v1189 = vpop.xlane.xlu0 %1188
        %v1190 = vsel %vm1162, %v1139, 0.0
        %1191 = vadd.xlane.f32.xlu0 %v1190
        %v1192 = vpop.xlane.xlu0 %1191
        %v1193 = vsel %vm1162, %v1140, 0.0
        %1194 = vadd.xlane.f32.xlu0 %v1193
        %v1195 = vpop.xlane.xlu0 %1194
        %v1196 = vsel %vm1162, %v1141, 0.0
        %1197 = vadd.xlane.f32.xlu0 %v1196
        %v1198 = vpop.xlane.xlu0 %1197
        %v1199 = vsel %vm1162, %v1142, 0.0
        %1200 = vadd.xlane.f32.xlu0 %v1199
        %v1201 = vpop.xlane.xlu0 %1200
        %v1202 = vsel %vm1162, %v1143, 0.0
        %1203 = vadd.xlane.f32.xlu0 %v1202
        %v1204 = vpop.xlane.xlu0 %1203
        %v1205 = vsel %vm1162, %v1144, 0.0
        %1206 = vadd.xlane.f32.xlu0 %v1205
        %v1207 = vpop.xlane.xlu0 %1206
        %v1208 = vsel %vm1162, %v1145, 0.0
        %1209 = vadd.xlane.f32.xlu0 %v1208
        %v1210 = vpop.xlane.xlu0 %1209
        %v1211 = vsel %vm1162, %v1146, 0.0
        %1212 = vadd.xlane.f32.xlu0 %v1211
        %v1213 = vpop.xlane.xlu0 %1212
        %v1214 = vsel %vm1162, %v1147, 0.0
        %1215 = vadd.xlane.f32.xlu0 %v1214
        %v1216 = vpop.xlane.xlu0 %1215
        %v1217 = vsel %vm1162, %v1148, 0.0
        %1218 = vadd.xlane.f32.xlu0 %v1217
        %v1219 = vpop.xlane.xlu0 %1218
        %v1220 = vsel %vm1162, %v1149, 0.0
        %1221 = vadd.xlane.f32.xlu0 %v1220
        %v1222 = vpop.xlane.xlu0 %1221
        %v1223 = vsel %vm1162, %v1150, 0.0
        %1224 = vadd.xlane.f32.xlu0 %v1223
        %v1225 = vpop.xlane.xlu0 %1224
        %v1226 = vsel %vm1162, %v1151, 0.0
        %1227 = vadd.xlane.f32.xlu0 %v1226
        %v1228 = vpop.xlane.xlu0 %1227
        %v1229 = vsel %vm1162, %v1152, 0.0
        %1230 = vadd.xlane.f32.xlu0 %v1229
        %v1231 = vpop.xlane.xlu0 %1230
        %v1232 = vsel %vm1162, %v1153, 0.0
        %1233 = vadd.xlane.f32.xlu0 %v1232
        %v1234 = vpop.xlane.xlu0 %1233
        %v1235 = vsel %vm1162, %v1154, 0.0
        %1236 = vadd.xlane.f32.xlu0 %v1235
        %v1237 = vpop.xlane.xlu0 %1236
        %v1238 = vsel %vm1162, %v1155, 0.0
        %1239 = vadd.xlane.f32.xlu0 %v1238
        %v1240 = vpop.xlane.xlu0 %1239
        %v1241 = vsel %vm1162, %v1156, 0.0
        %1242 = vadd.xlane.f32.xlu0 %v1241
        %v1243 = vpop.xlane.xlu0 %1242
        %v1244 = vsel %vm1162, %v1157, 0.0
        %1245 = vadd.xlane.f32.xlu0 %v1244
        %v1246 = vpop.xlane.xlu0 %1245
        %v1247 = vsel %vm1162, %v1158, 0.0
        %1248 = vadd.xlane.f32.xlu0 %v1247
        %v1249 = vpop.xlane.xlu0 %1248
        %v1250 = vsel %vm1162, %v1159, 0.0
        %1251 = vadd.xlane.f32.xlu0 %v1250
        %v1252 = vpop.xlane.xlu0 %1251
        %v1253 = vsel %vm1162, %v1160, 0.0
        %1254 = vadd.xlane.f32.xlu0 %v1253
        %v1255 = vpop.xlane.xlu0 %1254
        %v1256 = vsel %vm1162, %v1161, 0.0
        %1257 = vadd.xlane.f32.xlu0 %v1256
        %v1258 = vpop.xlane.xlu0 %1257
        %v1291 = vlaneseq
        %v1292 = vshrl.u32 %v1291, 7
        %v1293 = vsub.s32 %v1026, %v1292
        %v1294 = vrot.slane %v1165, %v1293
        %v1295 = vadd.s32 %v1026, 4294967288
        %v1296 = vlaneseq
        %v1297 = vshrl.u32 %v1296, 7
        %v1298 = vsub.s32 %v1295, %v1297
        %v1299 = vrot.slane %v1168, %v1298
        %vm1300 = vcmask 130112
        %v1301 = vsel %vm1300, %v1299, %v1294
        %v1302 = vadd.s32 %v1026, 4294967280
        %v1303 = vlaneseq
        %v1304 = vshrl.u32 %v1303, 7
        %v1305 = vsub.s32 %v1302, %v1304
        %v1306 = vrot.slane %v1171, %v1305
        %vm1307 = vcmask 195712
        %v1308 = vsel %vm1307, %v1306, %v1301
        %v1309 = vadd.s32 %v1026, 4294967272
        %v1310 = vlaneseq
        %v1311 = vshrl.u32 %v1310, 7
        %v1312 = vsub.s32 %v1309, %v1311
        %v1313 = vrot.slane %v1174, %v1312
        %vm1314 = vcmask 261312
        %v1315 = vsel %vm1314, %v1313, %v1308
        %v1316 = vadd.s32 %v1026, 4294967264
        %v1317 = vlaneseq
        %v1318 = vshrl.u32 %v1317, 7
        %v1319 = vsub.s32 %v1316, %v1318
        %v1320 = vrot.slane %v1177, %v1319
        %vm1321 = vcmask 326912
        %v1322 = vsel %vm1321, %v1320, %v1315
        %v1323 = vadd.s32 %v1026, 4294967256
        %v1324 = vlaneseq
        %v1325 = vshrl.u32 %v1324, 7
        %v1326 = vsub.s32 %v1323, %v1325
        %v1327 = vrot.slane %v1180, %v1326
        %vm1328 = vcmask 392512
        %v1329 = vsel %vm1328, %v1327, %v1322
        %v1330 = vadd.s32 %v1026, 4294967248
        %v1331 = vlaneseq
        %v1332 = vshrl.u32 %v1331, 7
        %v1333 = vsub.s32 %v1330, %v1332
        %v1334 = vrot.slane %v1183, %v1333
        %vm1335 = vcmask 458112
        %v1336 = vsel %vm1335, %v1334, %v1329
        %v1337 = vadd.s32 %v1026, 4294967240
        %v1338 = vlaneseq
        %v1339 = vshrl.u32 %v1338, 7
        %v1340 = vsub.s32 %v1337, %v1339
        %v1341 = vrot.slane %v1186, %v1340
        %vm1342 = vcmask 523712
        %v1343 = vsel %vm1342, %v1341, %v1336
        %v1344 = vadd.s32 %v1026, 4294967232
        %v1345 = vlaneseq
        %v1346 = vshrl.u32 %v1345, 7
        %v1347 = vsub.s32 %v1344, %v1346
        %v1348 = vrot.slane %v1189, %v1347
        %vm1349 = vcmask 589312
        %v1350 = vsel %vm1349, %v1348, %v1343
        %v1351 = vadd.s32 %v1026, 4294967224
        %v1352 = vlaneseq
        %v1353 = vshrl.u32 %v1352, 7
        %v1354 = vsub.s32 %v1351, %v1353
        %v1355 = vrot.slane %v1192, %v1354
        %vm1356 = vcmask 654912
        %v1357 = vsel %vm1356, %v1355, %v1350
        %v1358 = vadd.s32 %v1026, 4294967216
        %v1359 = vlaneseq
        %v1360 = vshrl.u32 %v1359, 7
        %v1361 = vsub.s32 %v1358, %v1360
        %v1362 = vrot.slane %v1195, %v1361
        %vm1363 = vcmask 720512
        %v1364 = vsel %vm1363, %v1362, %v1357
        %v1365 = vadd.s32 %v1026, 4294967208
        %v1366 = vlaneseq
        %v1367 = vshrl.u32 %v1366, 7
        %v1368 = vsub.s32 %v1365, %v1367
        %v1369 = vrot.slane %v1198, %v1368
        %vm1370 = vcmask 786112
        %v1371 = vsel %vm1370, %v1369, %v1364
        %v1372 = vadd.s32 %v1026, 4294967200
        %v1373 = vlaneseq
        %v1374 = vshrl.u32 %v1373, 7
        %v1375 = vsub.s32 %v1372, %v1374
        %v1376 = vrot.slane %v1201, %v1375
        %vm1377 = vcmask 851712
        %v1378 = vsel %vm1377, %v1376, %v1371
        %v1379 = vadd.s32 %v1026, 4294967192
        %v1380 = vlaneseq
        %v1381 = vshrl.u32 %v1380, 7
        %v1382 = vsub.s32 %v1379, %v1381
        %v1383 = vrot.slane %v1204, %v1382
        %vm1384 = vcmask 917312
        %v1385 = vsel %vm1384, %v1383, %v1378
        %v1386 = vadd.s32 %v1026, 4294967184
        %v1387 = vlaneseq
        %v1388 = vshrl.u32 %v1387, 7
        %v1389 = vsub.s32 %v1386, %v1388
        %v1390 = vrot.slane %v1207, %v1389
        %vm1391 = vcmask 982912
        %v1392 = vsel %vm1391, %v1390, %v1385
        %v1393 = vadd.s32 %v1026, 4294967176
        %v1394 = vlaneseq
        %v1395 = vshrl.u32 %v1394, 7
        %v1396 = vsub.s32 %v1393, %v1395
        %v1397 = vrot.slane %v1210, %v1396
        %vm1398 = vcmask 1048512
        %v1399 = vsel %vm1398, %v1397, %v1392
        %v1400 = vlaneseq
        %v1401 = vshrl.u32 %v1400, 7
        %v1402 = vsub.s32 %v1026, %v1401
        %v1403 = vrot.slane %v1213, %v1402
        %v1404 = vlaneseq
        %v1405 = vshrl.u32 %v1404, 7
        %v1406 = vsub.s32 %v1295, %v1405
        %v1407 = vrot.slane %v1216, %v1406
        %v1408 = vsel %vm1300, %v1407, %v1403
        %v1409 = vlaneseq
        %v1410 = vshrl.u32 %v1409, 7
        %v1411 = vsub.s32 %v1302, %v1410
        %v1412 = vrot.slane %v1219, %v1411
        %v1413 = vsel %vm1307, %v1412, %v1408
        %v1414 = vlaneseq
        %v1415 = vshrl.u32 %v1414, 7
        %v1416 = vsub.s32 %v1309, %v1415
        %v1417 = vrot.slane %v1222, %v1416
        %v1418 = vsel %vm1314, %v1417, %v1413
        %v1419 = vlaneseq
        %v1420 = vshrl.u32 %v1419, 7
        %v1421 = vsub.s32 %v1316, %v1420
        %v1422 = vrot.slane %v1225, %v1421
        %v1423 = vsel %vm1321, %v1422, %v1418
        %v1424 = vlaneseq
        %v1425 = vshrl.u32 %v1424, 7
        %v1426 = vsub.s32 %v1323, %v1425
        %v1427 = vrot.slane %v1228, %v1426
        %v1428 = vsel %vm1328, %v1427, %v1423
        %v1429 = vlaneseq
        %v1430 = vshrl.u32 %v1429, 7
        %v1431 = vsub.s32 %v1330, %v1430
        %v1432 = vrot.slane %v1231, %v1431
        %v1433 = vsel %vm1335, %v1432, %v1428
        %v1434 = vlaneseq
        %v1435 = vshrl.u32 %v1434, 7
        %v1436 = vsub.s32 %v1337, %v1435
        %v1437 = vrot.slane %v1234, %v1436
        %v1438 = vsel %vm1342, %v1437, %v1433
        %v1439 = vlaneseq
        %v1440 = vshrl.u32 %v1439, 7
        %v1441 = vsub.s32 %v1344, %v1440
        %v1442 = vrot.slane %v1237, %v1441
        %v1443 = vsel %vm1349, %v1442, %v1438
        %v1444 = vlaneseq
        %v1445 = vshrl.u32 %v1444, 7
        %v1446 = vsub.s32 %v1351, %v1445
        %v1447 = vrot.slane %v1240, %v1446
        %v1448 = vsel %vm1356, %v1447, %v1443
        %v1449 = vlaneseq
        %v1450 = vshrl.u32 %v1449, 7
        %v1451 = vsub.s32 %v1358, %v1450
        %v1452 = vrot.slane %v1243, %v1451
        %v1453 = vsel %vm1363, %v1452, %v1448
        %v1454 = vlaneseq
        %v1455 = vshrl.u32 %v1454, 7
        %v1456 = vsub.s32 %v1365, %v1455
        %v1457 = vrot.slane %v1246, %v1456
        %v1458 = vsel %vm1370, %v1457, %v1453
        %v1459 = vlaneseq
        %v1460 = vshrl.u32 %v1459, 7
        %v1461 = vsub.s32 %v1372, %v1460
        %v1462 = vrot.slane %v1249, %v1461
        %v1463 = vsel %vm1377, %v1462, %v1458
        %v1464 = vlaneseq
        %v1465 = vshrl.u32 %v1464, 7
        %v1466 = vsub.s32 %v1379, %v1465
        %v1467 = vrot.slane %v1252, %v1466
        %v1468 = vsel %vm1384, %v1467, %v1463
        %v1469 = vlaneseq
        %v1470 = vshrl.u32 %v1469, 7
        %v1471 = vsub.s32 %v1386, %v1470
        %v1472 = vrot.slane %v1255, %v1471
        %v1473 = vsel %vm1391, %v1472, %v1468
        %v1474 = vlaneseq
        %v1475 = vshrl.u32 %v1474, 7
        %v1476 = vsub.s32 %v1393, %v1475
        %v1477 = vrot.slane %v1258, %v1476
        %v1478 = vsel %vm1398, %v1477, %v1473
        %vm1479 = vcmask 1041409
        %v1480 = vsel %vm1479, %v1478, %v1399
        %v1482 = vsel %vm1033, %v1480, 0.0
        %vm1483 = vcmask 1041408
        %v1484 = vsel %vm1483, %v1482, 0.0
        %1485 = vadd.xlane.f32.xlu0 %v1484
        %v1486 = vpop.xlane.xlu0 %1485
        %v1487 = vrot.slane %v1486, 4
        %v1488 = vadd.f32 %v1486, %v1487
        %v1489 = vrot.slane %v1488, 2
        %v1490 = vadd.f32 %v1488, %v1489
        %v1491 = vrot.slane %v1490, 1
        %v1492 = vadd.f32 %v1490, %v1491
        %s1493 = vtos %v1492
        %v1494 = vld [vmem:[%s1000] sm:$0x3]
        %v1495 = vld [vmem:[%s1012] sm:$0x3]
        %v1496 = vsub.f32 %v1494, %v1495
        %v1497 = vmul.f32 %v1496, %v1496
        %v1498 = vsel %vm1033, %v1497, 0.0
        %v1499 = vsel %vm1483, %v1498, 0.0
        %1500 = vadd.xlane.f32.xlu0 %v1499
        %v1501 = vpop.xlane.xlu0 %1500
        %v1502 = vrot.slane %v1501, 4
        %v1503 = vadd.f32 %v1501, %v1502
        %v1504 = vrot.slane %v1503, 2
        %v1505 = vadd.f32 %v1503, %v1504
        %v1506 = vrot.slane %v1505, 1
        %v1507 = vadd.f32 %v1505, %v1506
        %s1508 = vtos %v1507
        %v1509 = vld [vmem:[%s1004] sm:$0x3]
        %v1510 = vld [vmem:[%s1016] sm:$0x3]
        %v1511 = vsub.f32 %v1509, %v1510
        %v1512 = vmul.f32 %v1511, %v1511
        %v1513 = vsel %vm1033, %v1512, 0.0
        %v1514 = vsel %vm1483, %v1513, 0.0
        %1515 = vadd.xlane.f32.xlu0 %v1514
        %v1516 = vpop.xlane.xlu0 %1515
        %v1517 = vrot.slane %v1516, 4
        %v1518 = vadd.f32 %v1516, %v1517
        %v1519 = vrot.slane %v1518, 2
        %v1520 = vadd.f32 %v1518, %v1519
        %v1521 = vrot.slane %v1520, 1
        %v1522 = vadd.f32 %v1520, %v1521
        %s1523 = vtos %v1522
        %v1524 = vld [vmem:[%s1008] sm:$0x3]
        %v1525 = vld [vmem:[%s1020] sm:$0x3]
        %v1526 = vsub.f32 %v1524, %v1525
        %v1527 = vmul.f32 %v1526, %v1526
        %v1528 = vsel %vm1033, %v1527, 0.0
        %v1529 = vsel %vm1483, %v1528, 0.0
        %1530 = vadd.xlane.f32.xlu0 %v1529
        %v1531 = vpop.xlane.xlu0 %1530
        %v1532 = vrot.slane %v1531, 4
        %v1533 = vadd.f32 %v1531, %v1532
        %v1534 = vrot.slane %v1533, 2
        %v1535 = vadd.f32 %v1533, %v1534
        %v1536 = vrot.slane %v1535, 1
        %v1537 = vadd.f32 %v1535, %v1536
        %s1538 = vtos %v1537
        %v1539 = vsel %vm1033, 1, 0
        %v1540 = vcvt.s32.f32 %v1539
        %v1541 = vsel %vm1483, %v1540, 0.0
        %1542 = vadd.xlane.f32.xlu0 %v1541
        %v1543 = vpop.xlane.xlu0 %1542
        %v1544 = vrot.slane %v1543, 4
        %v1545 = vadd.f32 %v1543, %v1544
        %v1546 = vrot.slane %v1545, 2
        %v1547 = vadd.f32 %v1545, %v1546
        %v1548 = vrot.slane %v1547, 1
        %v1549 = vadd.f32 %v1547, %v1548
        %s1550 = vtos %v1549
        %p1551 = scmp.eq.s32.totalorder %s24, 0
        // Predicated region
        $region173: #{tpu_custom_call.1} parent=163 // pred_check
          %p1552 = pneg %p1551
        $region174: #{tpu_custom_call.1} parent=163 // pred_check_branch
          %1554 = sbr.rel (%p1552) target = $region176
        $region175: #{tpu_custom_call.1} parent=163 // pred_region
          %s1555 = scalar_lea.smem [#allocation2], 0
          %1556 = sst [smem:[%s1555]] 0.0
          %s1557 = scalar_lea.smem [#allocation2], 1
          %1558 = sst [smem:[%s1557]] 0.0
          %s1559 = scalar_lea.smem [#allocation2], 2
          %1560 = sst [smem:[%s1559]] 0.0
          %s1561 = scalar_lea.smem [#allocation2], 3
          %1562 = sst [smem:[%s1561]] 0.0
          %s1563 = scalar_lea.smem [#allocation2], 4
          %1564 = sst [smem:[%s1563]] 0.0
        $region176: #{tpu_custom_call.1} parent=163 // pred_fallthru
          _
        %s1565 = sld [smem:[#allocation2]]
        %s1566 = sadd.f32 %s1565, %s1493
        %s1567 = scalar_lea.smem [#allocation2], 0
        %1568 = sst [smem:[%s1567]] %s1566
        %s1569 = sld [smem:[#allocation2 + $0x1]]
        %s1570 = sadd.f32 %s1569, %s1538
        %s1571 = scalar_lea.smem [#allocation2], 1
        %1572 = sst [smem:[%s1571]] %s1570
        %s1573 = sld [smem:[#allocation2 + $0x2]]
        %s1574 = sadd.f32 %s1573, %s1508
        %s1575 = scalar_lea.smem [#allocation2], 2
        %1576 = sst [smem:[%s1575]] %s1574
        %s1577 = sld [smem:[#allocation2 + $0x3]]
        %s1578 = sadd.f32 %s1577, %s1523
        %s1579 = scalar_lea.smem [#allocation2], 3
        %1580 = sst [smem:[%s1579]] %s1578
        %s1581 = sld [smem:[#allocation2 + $0x4]]
        %s1582 = sadd.f32 %s1581, %s1550
        %s1583 = scalar_lea.smem [#allocation2], 4
        %1584 = sst [smem:[%s1583]] %s1582
        %p1585 = scmp.eq.s32.totalorder %s24, 2
        // Predicated region
        $region177: #{tpu_custom_call.1} parent=163 // pred_check
          %p1586 = pneg %p1585
        $region178: #{tpu_custom_call.1} parent=163 // pred_check_branch
          %1588 = sbr.rel (%p1586) target = $region180
        $region179: #{tpu_custom_call.1} parent=163 // pred_region
          %v1589 = vld [vmem:[%s9] sm:$0x3]
          %v1590 = vcvt.s32.f32 %v1589
          %v1591 = vadd.f32 %v1590, 1.0
          %v1592 = vlog2.pop %v1591
          %v1593 = vmul.f32 %v1592, 0.6931472
          %v1594 = vld [vmem:[%s10] sm:$0x3]
          %v1595 = vsub.f32 %v1594, %v1593
          %v1596 = vld [vmem:[%s11] sm:$0x3]
          %vm1597 = vcmp.eq.s32.totalorder %v1596, 0
          %v1598 = vmul.f32 %v1595, %v1595
          %v1599 = vsel %vm1597, %v1598, 0.0
          %vm1600 = vcmask 189440
          %v1601 = vsel %vm1600, %v1599, 0.0
          %1602 = vadd.xlane.f32.xlu0 %v1601
          %v1603 = vpop.xlane.xlu0 %1602
          %v1604 = vrot.slane %v1603, 4
          %v1605 = vadd.f32 %v1603, %v1604
          %v1606 = vrot.slane %v1605, 2
          %v1607 = vadd.f32 %v1605, %v1606
          %v1608 = vrot.slane %v1607, 1
          %v1609 = vadd.f32 %v1607, %v1608
          %s1610 = vtos %v1609
          %v1611 = vsel %vm1597, 1, 0
          %v1612 = vcvt.s32.f32 %v1611
          %v1613 = vsel %vm1600, %v1612, 0.0
          %1614 = vadd.xlane.f32.xlu0 %v1613
          %v1615 = vpop.xlane.xlu0 %1614
          %v1616 = vrot.slane %v1615, 4
          %v1617 = vadd.f32 %v1615, %v1616
          %v1618 = vrot.slane %v1617, 2
          %v1619 = vadd.f32 %v1617, %v1618
          %v1620 = vrot.slane %v1619, 1
          %v1621 = vadd.f32 %v1619, %v1620
          %s1622 = vtos %v1621
          %s1623 = sld [smem:[#allocation2 + $0x4]]
          %v1624 = vstv %s1623
          %v1625 = vrcp.pop %v1624
          %s1626 = vtos %v1625
          %v1627 = vstv %s1622
          %v1628 = vrcp.pop %v1627
          %s1629 = vtos %v1628
          %s1630 = sld [smem:[#allocation2]]
          %s1631 = smul.f32 %s1630, %s1626
          %s1632 = smul.f32 %s1631, 0.083333336
          %s1633 = sld [smem:[#allocation2 + $0x1]]
          %s1634 = smul.f32 %s1633, %s1626
          %s1635 = sld [smem:[#allocation2 + $0x2]]
          %s1636 = smul.f32 %s1635, %s1626
          %s1637 = sld [smem:[#allocation2 + $0x3]]
          %s1638 = smul.f32 %s1637, %s1626
          %s1639 = smul.f32 %s1610, %s1629
          %s1640 = sadd.f32 %s1632, %s1639
          %s1641 = sadd.f32 %s1640, %s1636
          %s1642 = sadd.f32 %s1641, %s1638
          %s1643 = sadd.f32 %s1642, %s1634
          %s1644 = scalar_lea.smem [#allocation5], 0
          %1645 = sst [smem:[%s1644]] %s1643
          %s1646 = scalar_lea.smem [#allocation5], 1
          %1647 = sst [smem:[%s1646]] %s1632
          %s1648 = scalar_lea.smem [#allocation5], 2
          %1649 = sst [smem:[%s1648]] %s1634
          %s1650 = scalar_lea.smem [#allocation5], 3
          %1651 = sst [smem:[%s1650]] %s1636
          %s1652 = scalar_lea.smem [#allocation5], 4
          %1653 = sst [smem:[%s1652]] %s1638
          %s1654 = scalar_lea.smem [#allocation5], 5
          %1655 = sst [smem:[%s1654]] %s1639
        $region180: #{tpu_custom_call.1} parent=163 // pred_fallthru
          _
        // Predicated region
        $region181: #{tpu_custom_call.1} parent=163 // pred_check
          %p1656 = pneg %p334
        $region182: #{tpu_custom_call.1} parent=163 // pred_check_branch
          %1658 = sbr.rel (%p1656) target = $region184
        $region183: #{tpu_custom_call.1} parent=163 // pred_region
          %s1660 = ssub.s32 16, 16
          %1661 = vsyncadd [#allocation6], %s1660
          %1664 = dma.smem_to_hbm [#allocation5], 16, %s12, [#allocation6]
        $region184: #{tpu_custom_call.1} parent=163 // pred_fallthru
          _
        // Predicated region
        $region185: #{tpu_custom_call.1} parent=163 // pred_check
          %p1665 = pneg %p334
        $region186: #{tpu_custom_call.1} parent=163 // pred_check_branch
          %1667 = sbr.rel (%p1665) target = $region188
        $region187: #{tpu_custom_call.1} parent=163 // pred_region
          %1668 = dma.done [#allocation6], 16
        $region188: #{tpu_custom_call.1} parent=163 // pred_fallthru
          _
        %1669 = sfence
      $region164: #{tpu_custom_call.1} parent=5 // pred_fallthru
        _
      %p1670 = scmp.le.s32.totalorder 2, %s19
      // Predicated region
      $region189: #{tpu_custom_call.1} parent=5 // pred_check
        %p1671 = pneg %p1670
      $region190: #{tpu_custom_call.1} parent=5 // pred_check_branch
        %1673 = sbr.rel (%p1671) target = $region192
      $region191: #{tpu_custom_call.1} parent=5 // pred_region
        %s1674 = ssub.s32 %s19, 2
      $region192: #{tpu_custom_call.1} parent=5 // pred_fallthru
        _
    $region6: #{tpu_custom_call.1} parent=1 // loop_footer
      %s23 = sadd.s32 1, %s19
    $region7: #{tpu_custom_call.1} parent=1 // loop_footer_branch
      %18 = sbr.rel target = $region3
    $region8: #{tpu_custom_call.1} parent=1 // loop_exit
      _
    %1675 = vsyncpa [#allocation6], 1
    %s1676 = scalar_lea.sflag [#allocation6], 1
    %1677 = vsyncpa %s1676, 1

</llo_original>
